<compile_context>
chip_gen: v7x
topology: tpu7x:2x2x1
jax: 0.10.0
libtpu: 0.0.40
codegen_flags: <defaults>
</compile_context>

<pallas_src>
import jax
import jax.numpy as jnp
from jax import lax
from jax.experimental import pallas as pl
from jax.experimental.pallas import tpu as pltpu


def _gat_layer(x, adj, w, att_src, att_dst, bias):
    """Dense GATConv (heads=1):
       out_i = sum_j softmax_j(leakyrelu(<att_dst,h_i> + <att_src,h_j>)) * h_j + bias
    adj[i, j] == 1 iff there is an edge j -> i (self-loops included), else 0.
    """
    h = jnp.dot(x, w, preferred_element_type=jnp.float32)                 # [N, E]  MXU
    # destination term as a column, source term directly in row layout (no transpose).
    d_col = lax.dot_general(h, att_dst, (((1,), (1,)), ((), ())),
                            preferred_element_type=jnp.float32)           # [N, 1]
    s_row = lax.dot_general(att_src, h, (((1,), (1,)), ((), ())),
                            preferred_element_type=jnp.float32)           # [1, N]
    e = d_col + s_row                                                     # [N, N] VPU broadcast add
    e = jnp.where(e > 0, e, 0.2 * e)                                      # LeakyReLU(0.2)
    e = jnp.where(adj > 0.0, e, -1e30)                                    # mask non-edges ({0,1} adj)
    e = e - jnp.max(e, axis=-1, keepdims=True)
    p = jnp.exp(e)                                                        # masked entries underflow to 0
    denom = jnp.sum(p, axis=-1, keepdims=True)                            # self-loops => denom > 0
    alpha = p * pl.reciprocal(denom, approx=True)                         # EUP reciprocal
    out = jnp.dot(alpha, h, preferred_element_type=jnp.float32)           # [N, E]  MXU
    return out + bias


def tgn_snapshot_kernel(x_ref, adj_ref, wp_ref, emb_ref, small_ref,
                        w0_ref, w1_ref, out_ref):
    # packed tiny params: rows = [b_proj, att_src0, att_dst0, bias0,
    #                             att_src1, att_dst1, bias1, <pad>]
    small = small_ref[...]
    b_proj, att_src0, att_dst0, bias0 = small[0:1], small[1:2], small[2:3], small[3:4]
    att_src1, att_dst1, bias1 = small[4:5], small[5:6], small[6:7]

    adj = adj_ref[0]                                                      # [N, N]
    # feature projection + learned node embedding
    x = jnp.dot(x_ref[0], wp_ref[...], preferred_element_type=jnp.float32)
    x = x + b_proj + emb_ref[...]
    # GNN layer 0 (GATConv) + ReLU   (dropout = identity in eval mode)
    x = jnp.maximum(_gat_layer(x, adj, w0_ref[...], att_src0, att_dst0, bias0), 0.0)
    # GNN layer 1 (GATConv) + ReLU
    x = jnp.maximum(_gat_layer(x, adj, w1_ref[...], att_src1, att_dst1, bias1), 0.0)
    out_ref[0] = x


def tgn_embeddings(xs, adjs, params):
    """compute_temporal_embeddings for S stacked snapshots in ONE gridded pallas_call.

    xs:   [S, N, F]   node features per snapshot
    adjs: [S, N, N]   {0,1} adjacency (self-loops included) per snapshot
    returns [S, N, E]
    """
    S, N, F = xs.shape
    E = params["w_proj"].shape[1]
    # pack the 7 tiny [1,E] vectors into one sublane-aligned [8,E] tensor (one DMA).
    small = jnp.concatenate(
        [params["b_proj"], params["att_src0"], params["att_dst0"], params["bias0"],
         params["att_src1"], params["att_dst1"], params["bias1"],
         jnp.zeros((1, E), jnp.float32)], axis=0)

    const = lambda shape: pl.BlockSpec(shape, lambda s: (0,) * len(shape))
    return pl.pallas_call(
        tgn_snapshot_kernel,
        out_shape=jax.ShapeDtypeStruct((S, N, E), jnp.float32),
        grid=(S,),
        in_specs=[
            pl.BlockSpec((1, N, F), lambda s: (s, 0, 0)),   # per-snapshot features
            pl.BlockSpec((1, N, N), lambda s: (s, 0, 0)),   # per-snapshot adjacency
            const((F, E)),                                  # w_proj   (resident)
            const((N, E)),                                  # node_emb (resident)
            const((8, E)),                                  # packed small params
            const((E, E)),                                  # w0
            const((E, E)),                                  # w1
        ],
        out_specs=pl.BlockSpec((1, N, E), lambda s: (s, 0, 0)),
        compiler_params=pltpu.CompilerParams(dimension_semantics=("parallel",)),
    )(xs, adjs, params["w_proj"], params["node_emb"], small,
      params["w0"], params["w1"])


def tgn_forward(snapshots, params):
    """TemporalGraphNetwork.forward: snapshots is a list of (node_features, adj).

    With use_memory=False there is no cross-snapshot state and forward returns
    only all_embeddings[-1], so earlier snapshots are dead work and are skipped.
    """
    x_last, adj_last = snapshots[-1]
    return tgn_embeddings(x_last[None], adj_last[None], params)   # [1, N, E] == x.unsqueeze(0)


# ------------------------- pure-JAX reference ----------------------------------
def _ref_gat(x, adj, w, a_s, a_d, b):
    h = x @ w
    s = (h * a_s).sum(-1)
    d = (h * a_d).sum(-1)
    e = d[:, None] + s[None, :]
    e = jnp.where(e > 0, e, 0.2 * e)
    e = jnp.where(adj > 0, e, -jnp.inf)
    alpha = jax.nn.softmax(e, axis=-1)
    return alpha @ h + b


def _ref_snapshot(x, adj, p):
    x = x @ p["w_proj"] + p["b_proj"] + p["node_emb"]
    x = jnp.maximum(_ref_gat(x, adj, p["w0"], p["att_src0"], p["att_dst0"], p["bias0"]), 0.0)
    x = jnp.maximum(_ref_gat(x, adj, p["w1"], p["att_src1"], p["att_dst1"], p["bias1"]), 0.0)
    return x[None]


# ------------------------- setup ------------------------------------------------
def init_params(key, num_nodes, feat_dim, emb_dim):
    ks = jax.random.split(key, 8)
    def uniform(k, shape, bound):
        return jax.random.uniform(k, shape, jnp.float32, -bound, bound)
    glorot = lambda k, shape: uniform(k, shape, (6.0 / (shape[0] + shape[-1])) ** 0.5)
    return {
        # feature_projector: Linear(F, E) — stored pre-transposed as [F, E]
        "w_proj": uniform(ks[0], (feat_dim, emb_dim), 1.0 / feat_dim ** 0.5),
        "b_proj": uniform(ks[1], (1, emb_dim), 1.0 / feat_dim ** 0.5),
        # node_embedding: xavier_uniform [num_nodes, E]
        "node_emb": glorot(ks[2], (num_nodes, emb_dim)),
        # GATConv layer 0
        "w0": glorot(ks[3], (emb_dim, emb_dim)),
        "att_src0": glorot(ks[4], (1, emb_dim)),
        "att_dst0": glorot(ks[5], (1, emb_dim)),
        "bias0": jnp.zeros((1, emb_dim), jnp.float32),
        # GATConv layer 1
        "w1": glorot(ks[6], (emb_dim, emb_dim)),
        "att_src1": glorot(ks[7], (1, emb_dim)),
        "att_dst1": glorot(jax.random.fold_in(key, 99), (1, emb_dim)),
        "bias1": jnp.zeros((1, emb_dim), jnp.float32),
    }


def build_adjacency(edge_index, num_nodes):
    src, dst = edge_index[0], edge_index[1]
    adj = jnp.zeros((num_nodes, num_nodes), jnp.float32).at[dst, src].set(1.0)
    adj = jnp.maximum(adj, jnp.eye(num_nodes, dtype=jnp.float32))  # add self-loops
    return adj


if __name__ == "__main__":
    key = jax.random.PRNGKey(0)
    # num_nodes, node_feature_dim, embedding_dim (module default embedding_dim=128 -> lane-dense)
    N, F, E = 32, 16, 128
    params = init_params(key, N, F, E)

    # deterministic duplicate-free edge list: bidirectional ring
    idx = jnp.arange(N, dtype=jnp.int32)
    src = jnp.concatenate([idx, (idx + 1) % N])
    dst = jnp.concatenate([(idx + 1) % N, idx])
    edge_index = jnp.stack([src, dst])                 # [2, 2N]
    adj = build_adjacency(edge_index, N)

    # two temporal snapshots (use_memory=False -> no cross-snapshot state)
    kx0, kx1 = jax.random.split(jax.random.fold_in(key, 1))
    x0 = jax.random.normal(kx0, (N, F), jnp.float32)
    x1 = jax.random.normal(kx1, (N, F), jnp.float32)
    snapshots = [(x0, adj), (x1, adj)]

    # Fused multi-snapshot path (one gridded pallas_call, snapshot axis "parallel"):
    all_emb = tgn_embeddings(jnp.stack([x0, x1]), jnp.stack([adj, adj]), params)  # [2, N, E]

    # forward(): skips dead snapshots, computes only the last one.
    out = tgn_forward(snapshots, params)               # [1, N, E]
    out = jax.block_until_ready(out)
    all_emb = jax.block_until_ready(all_emb)

    ref0 = _ref_snapshot(x0, adj, params)
    ref1 = _ref_snapshot(x1, adj, params)
    assert out.shape == (1, N, E), out.shape
    # tolerance 2e-3 accounts for the EUP approx reciprocal in the softmax denominator
    assert jnp.allclose(all_emb[0], ref0[0], rtol=2e-3, atol=2e-3), \
        float(jnp.max(jnp.abs(all_emb[0] - ref0[0])))
    assert jnp.allclose(all_emb[1], ref1[0], rtol=2e-3, atol=2e-3), \
        float(jnp.max(jnp.abs(all_emb[1] - ref1[0])))
    assert jnp.allclose(out, ref1, rtol=2e-3, atol=2e-3), \
        float(jnp.max(jnp.abs(out - ref1)))
    print("KERNEL_OK")
</pallas_src>

<mosaic_0001>
module attributes {stable_mosaic.version = 11 : i64} {
  func.func @tgn_snapshot_kernel(%arg0: i32, %arg1: memref<1x32x16xf32, #tpu.memory_space<vmem>>, %arg2: memref<1x32x32xf32, #tpu.memory_space<vmem>>, %arg3: memref<16x128xf32, #tpu.memory_space<vmem>>, %arg4: memref<32x128xf32, #tpu.memory_space<vmem>>, %arg5: memref<8x128xf32, #tpu.memory_space<vmem>>, %arg6: memref<128x128xf32, #tpu.memory_space<vmem>>, %arg7: memref<128x128xf32, #tpu.memory_space<vmem>>, %arg8: memref<1x32x128xf32, #tpu.memory_space<vmem>>) attributes {dimension_semantics = [#tpu.dimension_semantics<parallel>], iteration_bounds = array<i64: 2>, scalar_prefetch = 0 : i64, scratch_operands = 0 : i64, tpu.core_type = #tpu.core_type<tc>, window_params = [{transform_indices = @transform_0, window_bounds = array<i64: 1, 32, 16>}, {transform_indices = @transform_1, window_bounds = array<i64: 1, 32, 32>}, {pipeline_mode = #tpu.pipeline_mode<synchronous>, transform_indices = @transform_2, window_bounds = array<i64: 16, 128>}, {pipeline_mode = #tpu.pipeline_mode<synchronous>, transform_indices = @transform_3, window_bounds = array<i64: 32, 128>}, {pipeline_mode = #tpu.pipeline_mode<synchronous>, transform_indices = @transform_4, window_bounds = array<i64: 8, 128>}, {pipeline_mode = #tpu.pipeline_mode<synchronous>, transform_indices = @transform_5, window_bounds = array<i64: 128, 128>}, {pipeline_mode = #tpu.pipeline_mode<synchronous>, transform_indices = @transform_6, window_bounds = array<i64: 128, 128>}, {transform_indices = @transform_7, window_bounds = array<i64: 1, 32, 128>}]} {
    %c0 = arith.constant 0 : index
    %c0_0 = arith.constant 0 : index
    %0 = vector.load %arg5[%c0, %c0_0] : memref<8x128xf32, #tpu.memory_space<vmem>>, vector<8x128xf32>
    %1 = vector.extract_strided_slice %0 {offsets = [0, 0], sizes = [1, 128], strides = [1, 1]} : vector<8x128xf32> to vector<1x128xf32>
    %2 = vector.extract_strided_slice %0 {offsets = [1, 0], sizes = [1, 128], strides = [1, 1]} : vector<8x128xf32> to vector<1x128xf32>
    %3 = vector.extract_strided_slice %0 {offsets = [2, 0], sizes = [1, 128], strides = [1, 1]} : vector<8x128xf32> to vector<1x128xf32>
    %4 = vector.extract_strided_slice %0 {offsets = [3, 0], sizes = [1, 128], strides = [1, 1]} : vector<8x128xf32> to vector<1x128xf32>
    %5 = vector.extract_strided_slice %0 {offsets = [4, 0], sizes = [1, 128], strides = [1, 1]} : vector<8x128xf32> to vector<1x128xf32>
    %6 = vector.extract_strided_slice %0 {offsets = [5, 0], sizes = [1, 128], strides = [1, 1]} : vector<8x128xf32> to vector<1x128xf32>
    %7 = vector.extract_strided_slice %0 {offsets = [6, 0], sizes = [1, 128], strides = [1, 1]} : vector<8x128xf32> to vector<1x128xf32>
    %c0_1 = arith.constant 0 : index
    %c0_2 = arith.constant 0 : index
    %c0_3 = arith.constant 0 : index
    %8 = vector.load %arg2[%c0_1, %c0_2, %c0_3] : memref<1x32x32xf32, #tpu.memory_space<vmem>>, vector<1x32x32xf32>
    %9 = vector.shape_cast %8 : vector<1x32x32xf32> to vector<32x32xf32>
    %c0_4 = arith.constant 0 : index
    %c0_5 = arith.constant 0 : index
    %c0_6 = arith.constant 0 : index
    %10 = vector.load %arg1[%c0_4, %c0_5, %c0_6] : memref<1x32x16xf32, #tpu.memory_space<vmem>>, vector<1x32x16xf32>
    %11 = vector.shape_cast %10 : vector<1x32x16xf32> to vector<32x16xf32>
    %c0_7 = arith.constant 0 : index
    %c0_8 = arith.constant 0 : index
    %12 = vector.load %arg3[%c0_7, %c0_8] : memref<16x128xf32, #tpu.memory_space<vmem>>, vector<16x128xf32>
    %cst = arith.constant dense<0.000000e+00> : vector<32x128xf32>
    %13 = tpu.matmul %11, %12, %cst {dimension_numbers = #tpu.dot_dimension_numbers<[1], [0], [0], [1], [0, 0, 1, 1], [], []>} : vector<32x16xf32>, vector<16x128xf32>, vector<32x128xf32> -> vector<32x128xf32>
    %14 = vector.broadcast %1 : vector<1x128xf32> to vector<32x128xf32>
    %15 = arith.addf %13, %14 : vector<32x128xf32>
    %c0_9 = arith.constant 0 : index
    %c0_10 = arith.constant 0 : index
    %16 = vector.load %arg4[%c0_9, %c0_10] : memref<32x128xf32, #tpu.memory_space<vmem>>, vector<32x128xf32>
    %17 = arith.addf %15, %16 : vector<32x128xf32>
    %c0_11 = arith.constant 0 : index
    %c0_12 = arith.constant 0 : index
    %18 = vector.load %arg6[%c0_11, %c0_12] : memref<128x128xf32, #tpu.memory_space<vmem>>, vector<128x128xf32>
    %cst_13 = arith.constant dense<0.000000e+00> : vector<32x128xf32>
    %19 = tpu.matmul %17, %18, %cst_13 {dimension_numbers = #tpu.dot_dimension_numbers<[1], [0], [0], [1], [0, 0, 1, 1], [], []>} : vector<32x128xf32>, vector<128x128xf32>, vector<32x128xf32> -> vector<32x128xf32>
    %cst_14 = arith.constant dense<0.000000e+00> : vector<32x1xf32>
    %20 = tpu.matmul %19, %3, %cst_14 {dimension_numbers = #tpu.dot_dimension_numbers<[1], [1], [0], [0], [0, 0, 1, 0], [], []>} : vector<32x128xf32>, vector<1x128xf32>, vector<32x1xf32> -> vector<32x1xf32>
    %cst_15 = arith.constant dense<0.000000e+00> : vector<1x32xf32>
    %21 = tpu.matmul %2, %19, %cst_15 {dimension_numbers = #tpu.dot_dimension_numbers<[1], [1], [0], [0], [0, 0, 1, 0], [], []>} : vector<1x128xf32>, vector<32x128xf32>, vector<1x32xf32> -> vector<1x32xf32>
    %22 = vector.broadcast %20 : vector<32x1xf32> to vector<32x32xf32>
    %23 = vector.broadcast %21 : vector<1x32xf32> to vector<32x32xf32>
    %24 = arith.addf %22, %23 : vector<32x32xf32>
    %cst_16 = arith.constant 0.000000e+00 : f32
    %25 = vector.broadcast %cst_16 : f32 to vector<32x32xf32>
    %26 = arith.cmpf ogt, %24, %25 : vector<32x32xf32>
    %cst_17 = arith.constant 2.000000e-01 : f32
    %27 = vector.broadcast %cst_17 : f32 to vector<32x32xf32>
    %28 = arith.mulf %27, %24 : vector<32x32xf32>
    %29 = arith.select %26, %24, %28 : vector<32x32xi1>, vector<32x32xf32>
    %cst_18 = arith.constant 0.000000e+00 : f32
    %30 = vector.broadcast %cst_18 : f32 to vector<32x32xf32>
    %31 = arith.cmpf ogt, %9, %30 : vector<32x32xf32>
    %cst_19 = arith.constant -1.000000e+30 : f32
    %32 = vector.broadcast %cst_19 : f32 to vector<32x32xf32>
    %33 = arith.select %31, %29, %32 : vector<32x32xi1>, vector<32x32xf32>
    %cst_20 = arith.constant dense<0xFF800000> : vector<32xf32>
    %34 = vector.multi_reduction <maximumf>, %33, %cst_20 [1] : vector<32x32xf32> to vector<32xf32>
    %35 = vector.shape_cast %34 : vector<32xf32> to vector<32x1xf32>
    %36 = vector.broadcast %35 : vector<32x1xf32> to vector<32x32xf32>
    %37 = arith.subf %33, %36 : vector<32x32xf32>
    %38 = math.exp %37 : vector<32x32xf32>
    %cst_21 = arith.constant dense<0.000000e+00> : vector<32xf32>
    %39 = vector.multi_reduction <add>, %38, %cst_21 [1] : vector<32x32xf32> to vector<32xf32>
    %40 = vector.shape_cast %39 : vector<32xf32> to vector<32x1xf32>
    %41 = tpu.reciprocal %40 {approx = true} : vector<32x1xf32> -> vector<32x1xf32>
    %42 = vector.broadcast %41 : vector<32x1xf32> to vector<32x32xf32>
    %43 = arith.mulf %38, %42 : vector<32x32xf32>
    %cst_22 = arith.constant dense<0.000000e+00> : vector<32x128xf32>
    %44 = tpu.matmul %43, %19, %cst_22 {dimension_numbers = #tpu.dot_dimension_numbers<[1], [0], [0], [1], [0, 0, 1, 1], [], []>} : vector<32x32xf32>, vector<32x128xf32>, vector<32x128xf32> -> vector<32x128xf32>
    %45 = vector.broadcast %4 : vector<1x128xf32> to vector<32x128xf32>
    %46 = arith.addf %44, %45 : vector<32x128xf32>
    %cst_23 = arith.constant 0.000000e+00 : f32
    %47 = vector.broadcast %cst_23 : f32 to vector<32x128xf32>
    %48 = arith.maximumf %46, %47 : vector<32x128xf32>
    %c0_24 = arith.constant 0 : index
    %c0_25 = arith.constant 0 : index
    %49 = vector.load %arg7[%c0_24, %c0_25] : memref<128x128xf32, #tpu.memory_space<vmem>>, vector<128x128xf32>
    %cst_26 = arith.constant dense<0.000000e+00> : vector<32x128xf32>
    %50 = tpu.matmul %48, %49, %cst_26 {dimension_numbers = #tpu.dot_dimension_numbers<[1], [0], [0], [1], [0, 0, 1, 1], [], []>} : vector<32x128xf32>, vector<128x128xf32>, vector<32x128xf32> -> vector<32x128xf32>
    %cst_27 = arith.constant dense<0.000000e+00> : vector<32x1xf32>
    %51 = tpu.matmul %50, %6, %cst_27 {dimension_numbers = #tpu.dot_dimension_numbers<[1], [1], [0], [0], [0, 0, 1, 0], [], []>} : vector<32x128xf32>, vector<1x128xf32>, vector<32x1xf32> -> vector<32x1xf32>
    %cst_28 = arith.constant dense<0.000000e+00> : vector<1x32xf32>
    %52 = tpu.matmul %5, %50, %cst_28 {dimension_numbers = #tpu.dot_dimension_numbers<[1], [1], [0], [0], [0, 0, 1, 0], [], []>} : vector<1x128xf32>, vector<32x128xf32>, vector<1x32xf32> -> vector<1x32xf32>
    %53 = vector.broadcast %51 : vector<32x1xf32> to vector<32x32xf32>
    %54 = vector.broadcast %52 : vector<1x32xf32> to vector<32x32xf32>
    %55 = arith.addf %53, %54 : vector<32x32xf32>
    %cst_29 = arith.constant 0.000000e+00 : f32
    %56 = vector.broadcast %cst_29 : f32 to vector<32x32xf32>
    %57 = arith.cmpf ogt, %55, %56 : vector<32x32xf32>
    %cst_30 = arith.constant 2.000000e-01 : f32
    %58 = vector.broadcast %cst_30 : f32 to vector<32x32xf32>
    %59 = arith.mulf %58, %55 : vector<32x32xf32>
    %60 = arith.select %57, %55, %59 : vector<32x32xi1>, vector<32x32xf32>
    %cst_31 = arith.constant 0.000000e+00 : f32
    %61 = vector.broadcast %cst_31 : f32 to vector<32x32xf32>
    %62 = arith.cmpf ogt, %9, %61 : vector<32x32xf32>
    %cst_32 = arith.constant -1.000000e+30 : f32
    %63 = vector.broadcast %cst_32 : f32 to vector<32x32xf32>
    %64 = arith.select %62, %60, %63 : vector<32x32xi1>, vector<32x32xf32>
    %cst_33 = arith.constant dense<0xFF800000> : vector<32xf32>
    %65 = vector.multi_reduction <maximumf>, %64, %cst_33 [1] : vector<32x32xf32> to vector<32xf32>
    %66 = vector.shape_cast %65 : vector<32xf32> to vector<32x1xf32>
    %67 = vector.broadcast %66 : vector<32x1xf32> to vector<32x32xf32>
    %68 = arith.subf %64, %67 : vector<32x32xf32>
    %69 = math.exp %68 : vector<32x32xf32>
    %cst_34 = arith.constant dense<0.000000e+00> : vector<32xf32>
    %70 = vector.multi_reduction <add>, %69, %cst_34 [1] : vector<32x32xf32> to vector<32xf32>
    %71 = vector.shape_cast %70 : vector<32xf32> to vector<32x1xf32>
    %72 = tpu.reciprocal %71 {approx = true} : vector<32x1xf32> -> vector<32x1xf32>
    %73 = vector.broadcast %72 : vector<32x1xf32> to vector<32x32xf32>
    %74 = arith.mulf %69, %73 : vector<32x32xf32>
    %cst_35 = arith.constant dense<0.000000e+00> : vector<32x128xf32>
    %75 = tpu.matmul %74, %50, %cst_35 {dimension_numbers = #tpu.dot_dimension_numbers<[1], [0], [0], [1], [0, 0, 1, 1], [], []>} : vector<32x32xf32>, vector<32x128xf32>, vector<32x128xf32> -> vector<32x128xf32>
    %76 = vector.broadcast %7 : vector<1x128xf32> to vector<32x128xf32>
    %77 = arith.addf %75, %76 : vector<32x128xf32>
    %cst_36 = arith.constant 0.000000e+00 : f32
    %78 = vector.broadcast %cst_36 : f32 to vector<32x128xf32>
    %79 = arith.maximumf %77, %78 : vector<32x128xf32>
    %c0_37 = arith.constant 0 : index
    %c0_38 = arith.constant 0 : index
    %c0_39 = arith.constant 0 : index
    %80 = vector.load %arg8[%c0_37, %c0_38, %c0_39] : memref<1x32x128xf32, #tpu.memory_space<vmem>>, vector<1x32x128xf32>
    %81 = vector.shape_cast %80 : vector<1x32x128xf32> to vector<32x128xf32>
    %82 = vector.shape_cast %79 : vector<32x128xf32> to vector<1x32x128xf32>
    tpu.vector_store %arg8[%c0_37, %c0_38, %c0_39], %82 {strides = array<i32>} : memref<1x32x128xf32, #tpu.memory_space<vmem>>, vector<1x32x128xf32>,
    return
  }
  func.func @transform_0(%arg0: i32) -> (i32, i32, i32) {
    %c0_i32 = arith.constant 0 : i32
    %c0_i32_0 = arith.constant 0 : i32
    %c0_i32_1 = arith.constant 0 : i32
    return %arg0, %c0_i32, %c0_i32_0 : i32, i32, i32
  }
  func.func @transform_1(%arg0: i32) -> (i32, i32, i32) {
    %c0_i32 = arith.constant 0 : i32
    %c0_i32_0 = arith.constant 0 : i32
    %c0_i32_1 = arith.constant 0 : i32
    return %arg0, %c0_i32, %c0_i32_0 : i32, i32, i32
  }
  func.func @transform_2(%arg0: i32) -> (i32, i32) {
    %c0_i32 = arith.constant 0 : i32
    %c0_i32_0 = arith.constant 0 : i32
    %c0_i32_1 = arith.constant 0 : i32
    return %c0_i32, %c0_i32_0 : i32, i32
  }
  func.func @transform_3(%arg0: i32) -> (i32, i32) {
    %c0_i32 = arith.constant 0 : i32
    %c0_i32_0 = arith.constant 0 : i32
    %c0_i32_1 = arith.constant 0 : i32
    return %c0_i32, %c0_i32_0 : i32, i32
  }
  func.func @transform_4(%arg0: i32) -> (i32, i32) {
    %c0_i32 = arith.constant 0 : i32
    %c0_i32_0 = arith.constant 0 : i32
    %c0_i32_1 = arith.constant 0 : i32
    return %c0_i32, %c0_i32_0 : i32, i32
  }
  func.func @transform_5(%arg0: i32) -> (i32, i32) {
    %c0_i32 = arith.constant 0 : i32
    %c0_i32_0 = arith.constant 0 : i32
    %c0_i32_1 = arith.constant 0 : i32
    return %c0_i32, %c0_i32_0 : i32, i32
  }
  func.func @transform_6(%arg0: i32) -> (i32, i32) {
    %c0_i32 = arith.constant 0 : i32
    %c0_i32_0 = arith.constant 0 : i32
    %c0_i32_1 = arith.constant 0 : i32
    return %c0_i32, %c0_i32_0 : i32, i32
  }
  func.func @transform_7(%arg0: i32) -> (i32, i32, i32) {
    %c0_i32 = arith.constant 0 : i32
    %c0_i32_0 = arith.constant 0 : i32
    %c0_i32_1 = arith.constant 0 : i32
    return %arg0, %c0_i32, %c0_i32_0 : i32, i32, i32
  }
}

</mosaic_0001>

<llo_original>
// kernel: tpu_custom_call.1
$region0: #{tpu_custom_call.1}
  #allocation0 [shape = 'u32[]', space=smem, size = 0x4, offset = 0x4, fixed_abs, tag = 'smem constant byte address 0x4 - core index']
  #allocation1 [shape = 'u32[144,128]{1,0:T(1,128)}', space=vmem, size = 0x12000, scoped, tag = 'internal scratch']
  %s0 = inlined_call_operand.vmem [shape: f32[2,32,16], index: 0, kind: input, shape index: {}]
  %s1 = inlined_call_operand.vmem [shape: f32[2,32,32], index: 1, kind: input, shape index: {}]
  %s2 = inlined_call_operand.hbm [shape: f32[16,128], index: 2, kind: input, shape index: {}]
  %s3 = inlined_call_operand.vmem [shape: f32[32,128], index: 3, kind: input, shape index: {}]
  %s4 = inlined_call_operand.vmem [shape: f32[8,128], index: 4, kind: input, shape index: {}]
  %s5 = inlined_call_operand.hbm [shape: f32[128,128], index: 5, kind: input, shape index: {}]
  %s6 = inlined_call_operand.hbm [shape: f32[128,128], index: 6, kind: input, shape index: {}]
  %s7 = inlined_call_operand.hbm [shape: f32[2,32,128], index: 7, kind: output, shape index: {}]
  %s8 = sld [smem:[#allocation0]]
  $region73: #{tpu_custom_call.1} parent=0
    _
  %s10 = ssub.s32 1, %s8
  %s11 = scalar_select 0, %s10, %s8
  $region1: #{tpu_custom_call.1} parent=0
    #allocation2 [shape = 'u8[8192]{0}', space=vmem, size = 0x2000, scoped, tag = 'input window, operand 2, single buffered']
    #allocation3 [shape = 's32[2]{0}', space=sflag, size = 0x8, scoped, tag = 'scoped memory for tpu_custom_call.1']
    #allocation4 [shape = 's32[2]{0}', space=sflag, size = 0x8, scoped, tag = 'scoped memory for tpu_custom_call.1']
    #allocation5 [shape = 'u8[65536]{0}', space=vmem, size = 0x10000, scoped, tag = 'input window, operand 5, single buffered']
    #allocation6 [shape = 's32[1]{0}', space=sflag, size = 0x4, scoped, tag = 'scoped memory for tpu_custom_call.1']
    #allocation7 [shape = 'u8[65536]{0}', space=vmem, size = 0x10000, scoped, tag = 'input window, operand 6, single buffered']
    #allocation8 [shape = 'u8[32768]{0}', space=vmem, size = 0x8000, scoped, tag = 'output window, operand 0']
    %12 = vsyncpa [#allocation3], 0
    %13 = vsyncpa [#allocation6], 0
    %14 = vsyncpa [#allocation4], 0
    %s15 = scalar_lea.sflag [#allocation4], 1
    %16 = vsyncpa %s15, 0
    loop: start=0, step=1, limit=4
    $region2: #{tpu_custom_call.1} parent=1 // loop_pre_header
      _
    $region3: #{tpu_custom_call.1} parent=1 // loop_header
      %s18 = sphi 0, %s22
      %p19 = scmp.ge.s32.totalorder %s18, 4
      %s28 = sphi 0, %s30
      %s31 = sphi 0, %s28
      %s32 = sphi 0, %s31
      %s48 = sphi 0, %s32
      %s54 = sphi 0, %s56
      %s57 = sphi 0, %s54
      %s58 = sphi 0, %s57
      %s74 = sphi 0, %s58
      %s78 = sphi 0, %s78
      %s80 = sphi 0, %s78
      %s81 = sphi 0, %s80
      %s95 = sphi 0, %s81
      %s99 = sphi 0, %s99
      %s101 = sphi 0, %s99
      %s102 = sphi 0, %s101
      %s116 = sphi 0, %s102
      %s120 = sphi 0, %s120
      %s122 = sphi 0, %s120
      %s123 = sphi 0, %s122
      %s137 = sphi 0, %s123
      %s141 = sphi 0, %s141
      %s143 = sphi 0, %s141
      %s144 = sphi 0, %s143
      %s158 = sphi 0, %s144
      %s162 = sphi 0, %s162
      %s164 = sphi 0, %s162
      %s165 = sphi 0, %s164
      %s179 = sphi 0, %s165
      %s185 = sphi 0, %s187
      %s188 = sphi 0, %s185
      %s189 = sphi 0, %s188
      %s205 = sphi 0, %s189
    $region4: #{tpu_custom_call.1} parent=1 // loop_header_branch
      %21 = sbr.rel (%p19) target = $region8
    $region5: #{tpu_custom_call.1} parent=1 // loop_body
      %s23 = ssub.s32 %s18, 1
      %s24 = ssub.s32 %s18, 2
      %s25 = sadd.s32 %s18, 1
      %s26 = ssub.s32 %s18, %s25
      %p27 = scmp.eq.s32.totalorder %s26, 0
      %s29 = sadd.s32 %s28, 1
      %s30 = scalar_select %p27, %s28, %s29
      %p33 = pneg %p27
      %p34 = scmp.eq.s32.totalorder %s18, 1
      %p35 = por %p33, %p34
      %p36 = scmp.ne.s32.totalorder %s28, %s31
      %p37 = scmp.eq.s32.totalorder %s18, 0
      %p38 = por %p36, %p37
      %p39 = scmp.ne.s32.totalorder %s28, %s31
      %p40 = scmp.eq.s32.totalorder %s23, 1
      %p41 = por %p39, %p40
      %p42 = scmp.ne.s32.totalorder %s31, %s32
      %p43 = scmp.eq.s32.totalorder %s23, 0
      %p44 = por %p42, %p43
      %p45 = scmp.ne.s32.totalorder %s31, %s32
      %p46 = scmp.eq.s32.totalorder %s24, 1
      %p47 = por %p45, %p46
      %p49 = scmp.ne.s32.totalorder %s32, %s48
      %p50 = scmp.eq.s32.totalorder %s24, 0
      %p51 = por %p49, %p50
      %s52 = ssub.s32 %s18, %s25
      %p53 = scmp.eq.s32.totalorder %s52, 0
      %s55 = sadd.s32 %s54, 1
      %s56 = scalar_select %p53, %s54, %s55
      %p59 = pneg %p53
      %p60 = scmp.eq.s32.totalorder %s18, 1
      %p61 = por %p59, %p60
      %p62 = scmp.ne.s32.totalorder %s54, %s57
      %p63 = scmp.eq.s32.totalorder %s18, 0
      %p64 = por %p62, %p63
      %p65 = scmp.ne.s32.totalorder %s54, %s57
      %p66 = scmp.eq.s32.totalorder %s23, 1
      %p67 = por %p65, %p66
      %p68 = scmp.ne.s32.totalorder %s57, %s58
      %p69 = scmp.eq.s32.totalorder %s23, 0
      %p70 = por %p68, %p69
      %p71 = scmp.ne.s32.totalorder %s57, %s58
      %p72 = scmp.eq.s32.totalorder %s24, 1
      %p73 = por %p71, %p72
      %p75 = scmp.ne.s32.totalorder %s58, %s74
      %p76 = scmp.eq.s32.totalorder %s24, 0
      %p77 = por %p75, %p76
      %s79 = sadd.s32 %s78, 1
      %p82 = scmp.eq.s32.totalorder %s18, 1
      %p83 = scmp.ne.s32.totalorder %s78, %s80
      %p84 = scmp.eq.s32.totalorder %s18, 0
      %p85 = por %p83, %p84
      %p86 = scmp.ne.s32.totalorder %s78, %s80
      %p87 = scmp.eq.s32.totalorder %s23, 1
      %p88 = por %p86, %p87
      %p89 = scmp.ne.s32.totalorder %s80, %s81
      %p90 = scmp.eq.s32.totalorder %s23, 0
      %p91 = por %p89, %p90
      %p92 = scmp.ne.s32.totalorder %s80, %s81
      %p93 = scmp.eq.s32.totalorder %s24, 1
      %p94 = por %p92, %p93
      %p96 = scmp.ne.s32.totalorder %s81, %s95
      %p97 = scmp.eq.s32.totalorder %s24, 0
      %p98 = por %p96, %p97
      %s100 = sadd.s32 %s99, 1
      %p103 = scmp.eq.s32.totalorder %s18, 1
      %p104 = scmp.ne.s32.totalorder %s99, %s101
      %p105 = scmp.eq.s32.totalorder %s18, 0
      %p106 = por %p104, %p105
      %p107 = scmp.ne.s32.totalorder %s99, %s101
      %p108 = scmp.eq.s32.totalorder %s23, 1
      %p109 = por %p107, %p108
      %p110 = scmp.ne.s32.totalorder %s101, %s102
      %p111 = scmp.eq.s32.totalorder %s23, 0
      %p112 = por %p110, %p111
      %p113 = scmp.ne.s32.totalorder %s101, %s102
      %p114 = scmp.eq.s32.totalorder %s24, 1
      %p115 = por %p113, %p114
      %p117 = scmp.ne.s32.totalorder %s102, %s116
      %p118 = scmp.eq.s32.totalorder %s24, 0
      %p119 = por %p117, %p118
      %s121 = sadd.s32 %s120, 1
      %p124 = scmp.eq.s32.totalorder %s18, 1
      %p125 = scmp.ne.s32.totalorder %s120, %s122
      %p126 = scmp.eq.s32.totalorder %s18, 0
      %p127 = por %p125, %p126
      %p128 = scmp.ne.s32.totalorder %s120, %s122
      %p129 = scmp.eq.s32.totalorder %s23, 1
      %p130 = por %p128, %p129
      %p131 = scmp.ne.s32.totalorder %s122, %s123
      %p132 = scmp.eq.s32.totalorder %s23, 0
      %p133 = por %p131, %p132
      %p134 = scmp.ne.s32.totalorder %s122, %s123
      %p135 = scmp.eq.s32.totalorder %s24, 1
      %p136 = por %p134, %p135
      %p138 = scmp.ne.s32.totalorder %s123, %s137
      %p139 = scmp.eq.s32.totalorder %s24, 0
      %p140 = por %p138, %p139
      %s142 = sadd.s32 %s141, 1
      %p145 = scmp.eq.s32.totalorder %s18, 1
      %p146 = scmp.ne.s32.totalorder %s141, %s143
      %p147 = scmp.eq.s32.totalorder %s18, 0
      %p148 = por %p146, %p147
      %p149 = scmp.ne.s32.totalorder %s141, %s143
      %p150 = scmp.eq.s32.totalorder %s23, 1
      %p151 = por %p149, %p150
      %p152 = scmp.ne.s32.totalorder %s143, %s144
      %p153 = scmp.eq.s32.totalorder %s23, 0
      %p154 = por %p152, %p153
      %p155 = scmp.ne.s32.totalorder %s143, %s144
      %p156 = scmp.eq.s32.totalorder %s24, 1
      %p157 = por %p155, %p156
      %p159 = scmp.ne.s32.totalorder %s144, %s158
      %p160 = scmp.eq.s32.totalorder %s24, 0
      %p161 = por %p159, %p160
      %s163 = sadd.s32 %s162, 1
      %p166 = scmp.eq.s32.totalorder %s18, 1
      %p167 = scmp.ne.s32.totalorder %s162, %s164
      %p168 = scmp.eq.s32.totalorder %s18, 0
      %p169 = por %p167, %p168
      %p170 = scmp.ne.s32.totalorder %s162, %s164
      %p171 = scmp.eq.s32.totalorder %s23, 1
      %p172 = por %p170, %p171
      %p173 = scmp.ne.s32.totalorder %s164, %s165
      %p174 = scmp.eq.s32.totalorder %s23, 0
      %p175 = por %p173, %p174
      %p176 = scmp.ne.s32.totalorder %s164, %s165
      %p177 = scmp.eq.s32.totalorder %s24, 1
      %p178 = por %p176, %p177
      %p180 = scmp.ne.s32.totalorder %s165, %s179
      %p181 = scmp.eq.s32.totalorder %s24, 0
      %p182 = por %p180, %p181
      %s183 = ssub.s32 %s18, %s25
      %p184 = scmp.eq.s32.totalorder %s183, 0
      %s186 = sadd.s32 %s185, 1
      %s187 = scalar_select %p184, %s185, %s186
      %p190 = pneg %p184
      %p191 = scmp.eq.s32.totalorder %s18, 1
      %p192 = por %p190, %p191
      %p193 = scmp.ne.s32.totalorder %s185, %s188
      %p194 = scmp.eq.s32.totalorder %s18, 0
      %p195 = por %p193, %p194
      %p196 = scmp.ne.s32.totalorder %s185, %s188
      %p197 = scmp.eq.s32.totalorder %s23, 1
      %p198 = por %p196, %p197
      %p199 = scmp.ne.s32.totalorder %s188, %s189
      %p200 = scmp.eq.s32.totalorder %s23, 0
      %p201 = por %p199, %p200
      %p202 = scmp.ne.s32.totalorder %s188, %s189
      %p203 = scmp.eq.s32.totalorder %s24, 1
      %p204 = por %p202, %p203
      %p206 = scmp.ne.s32.totalorder %s189, %s205
      %p207 = scmp.eq.s32.totalorder %s24, 0
      %p208 = por %p206, %p207
      %p209 = scmp.le.s32.totalorder 1, %s18
      %p210 = scmp.lt.s32.totalorder %s18, 3
      %p211 = pnand %p209, %p210
      %p212 = pneg %p211
      // Predicated region
      $region9: #{tpu_custom_call.1} parent=5 // pred_check
        _
      $region10: #{tpu_custom_call.1} parent=5 // pred_check_branch
        %214 = sbr.rel (%p211) target = $region12
      $region11: #{tpu_custom_call.1} parent=5 // pred_region
        %s215 = ssub.s32 %s18, 1
        // Predicated region
        $region13: #{tpu_custom_call.1} parent=11 // pred_check
          %p216 = pneg %p91
        $region14: #{tpu_custom_call.1} parent=11 // pred_check_branch
          %218 = sbr.rel (%p216) target = $region16
        $region15: #{tpu_custom_call.1} parent=11 // pred_region
          %s220 = ssub.s32 256, 256
          %221 = vsyncadd [#allocation3], %s220
          %s222 = sshll.u32 [#allocation2], 4
          %s223 = int_to_ptr.vmem [resolvable:$true] %s222
          %228 = dma.hbm_to_vmem [thread:$0]  %s2, 256, %s223, [#allocation3], 128, 128, 8
        $region16: #{tpu_custom_call.1} parent=11 // pred_fallthru
          _
        // Predicated region
        $region17: #{tpu_custom_call.1} parent=11 // pred_check
          %p229 = pneg %p112
        $region18: #{tpu_custom_call.1} parent=11 // pred_check_branch
          %231 = sbr.rel (%p229) target = $region20
        $region19: #{tpu_custom_call.1} parent=11 // pred_region
          _
        $region20: #{tpu_custom_call.1} parent=11 // pred_fallthru
          _
        // Predicated region
        $region21: #{tpu_custom_call.1} parent=11 // pred_check
          %p232 = pneg %p133
        $region22: #{tpu_custom_call.1} parent=11 // pred_check_branch
          %234 = sbr.rel (%p232) target = $region24
        $region23: #{tpu_custom_call.1} parent=11 // pred_region
          _
        $region24: #{tpu_custom_call.1} parent=11 // pred_fallthru
          _
        // Predicated region
        $region25: #{tpu_custom_call.1} parent=11 // pred_check
          %p235 = pneg %p154
        $region26: #{tpu_custom_call.1} parent=11 // pred_check_branch
          %237 = sbr.rel (%p235) target = $region28
        $region27: #{tpu_custom_call.1} parent=11 // pred_region
          %s239 = ssub.s32 2048, 2048
          %240 = vsyncadd [#allocation6], %s239
          %s241 = sshll.u32 [#allocation5], 4
          %s242 = int_to_ptr.vmem [resolvable:$true] %s241
          %247 = dma.hbm_to_vmem [thread:$0]  %s5, 2048, %s242, [#allocation6], 128, 128, 8
        $region28: #{tpu_custom_call.1} parent=11 // pred_fallthru
          _
        // Predicated region
        $region29: #{tpu_custom_call.1} parent=11 // pred_check
          %p248 = pneg %p175
        $region30: #{tpu_custom_call.1} parent=11 // pred_check_branch
          %250 = sbr.rel (%p248) target = $region32
        $region31: #{tpu_custom_call.1} parent=11 // pred_region
          %s252 = ssub.s32 2048, 2048
          %253 = vsyncadd [#allocation6], %s252
          %s254 = sshll.u32 [#allocation7], 4
          %s255 = int_to_ptr.vmem [resolvable:$true] %s254
          %260 = dma.hbm_to_vmem [thread:$0]  %s6, 2048, %s255, [#allocation6], 128, 128, 8
        $region32: #{tpu_custom_call.1} parent=11 // pred_fallthru
          _
      $region12: #{tpu_custom_call.1} parent=5 // pred_fallthru
        _
      %p261 = scmp.lt.s32.totalorder %s18, 2
      // Predicated region
      $region33: #{tpu_custom_call.1} parent=5 // pred_check
        %p262 = pneg %p261
      $region34: #{tpu_custom_call.1} parent=5 // pred_check_branch
        %264 = sbr.rel (%p262) target = $region36
      $region35: #{tpu_custom_call.1} parent=5 // pred_region
        // Predicated region
        $region37: #{tpu_custom_call.1} parent=35 // pred_check
          %p265 = pneg %p38
        $region38: #{tpu_custom_call.1} parent=35 // pred_check_branch
          %267 = sbr.rel (%p265) target = $region40
        $region39: #{tpu_custom_call.1} parent=35 // pred_region
          %p268 = scmp.lt.s32.totalorder %s18, 1
          %s269 = scalar_select %p268, %s18, 1
          %s270 = smul.addr %s269, 4
          %s271 = smul.addr %s270, 8
          %s272 = scalar_lea.vmem %s0, %s271
        $region40: #{tpu_custom_call.1} parent=35 // pred_fallthru
          _
        // Predicated region
        $region41: #{tpu_custom_call.1} parent=35 // pred_check
          %p273 = pneg %p64
        $region42: #{tpu_custom_call.1} parent=35 // pred_check_branch
          %275 = sbr.rel (%p273) target = $region44
        $region43: #{tpu_custom_call.1} parent=35 // pred_region
          %p276 = scmp.lt.s32.totalorder %s18, 1
          %s277 = scalar_select %p276, %s18, 1
          %s278 = smul.addr %s277, 4
          %s279 = smul.addr %s278, 8
          %s280 = scalar_lea.vmem %s1, %s279
        $region44: #{tpu_custom_call.1} parent=35 // pred_fallthru
          _
      $region36: #{tpu_custom_call.1} parent=5 // pred_fallthru
        _
      %p281 = scmp.le.s32.totalorder 1, %s18
      %p282 = scmp.lt.s32.totalorder %s18, 3
      %p283 = pnand %p281, %p282
      %p284 = pneg %p283
      // Predicated region
      $region45: #{tpu_custom_call.1} parent=5 // pred_check
        _
      $region46: #{tpu_custom_call.1} parent=5 // pred_check_branch
        %286 = sbr.rel (%p283) target = $region48
      $region47: #{tpu_custom_call.1} parent=5 // pred_region
        %s287 = ssub.s32 %s18, 1
        // Predicated region
        $region49: #{tpu_custom_call.1} parent=47 // pred_check
          %p288 = pneg %p91
        $region50: #{tpu_custom_call.1} parent=47 // pred_check_branch
          %290 = sbr.rel (%p288) target = $region52
        $region51: #{tpu_custom_call.1} parent=47 // pred_region
          %291 = dma.done [#allocation3], 256
        $region52: #{tpu_custom_call.1} parent=47 // pred_fallthru
          _
        // Predicated region
        $region53: #{tpu_custom_call.1} parent=47 // pred_check
          %p292 = pneg %p154
        $region54: #{tpu_custom_call.1} parent=47 // pred_check_branch
          %294 = sbr.rel (%p292) target = $region56
        $region55: #{tpu_custom_call.1} parent=47 // pred_region
          %295 = dma.done [#allocation6], 2048
        $region56: #{tpu_custom_call.1} parent=47 // pred_fallthru
          _
        // Predicated region
        $region57: #{tpu_custom_call.1} parent=47 // pred_check
          %p296 = pneg %p175
        $region58: #{tpu_custom_call.1} parent=47 // pred_check_branch
          %298 = sbr.rel (%p296) target = $region60
        $region59: #{tpu_custom_call.1} parent=47 // pred_region
          %299 = dma.done [#allocation6], 2048
        $region60: #{tpu_custom_call.1} parent=47 // pred_fallthru
          _
        %p300 = scmp.lt.s32.totalorder %s23, 1
        %s301 = scalar_select %p300, %s23, 1
        %s302 = smul.addr %s301, 4
        %s303 = smul.addr %s302, 8
        %s304 = scalar_lea.vmem %s0, %s303
        %p305 = pneg %p44
        %p306 = pneg %p41
        %p307 = scmp.lt.s32.totalorder %s23, 1
        %s308 = scalar_select %p307, %s23, 1
        %s309 = smul.addr %s308, 4
        %s310 = smul.addr %s309, 8
        %s311 = scalar_lea.vmem %s1, %s310
        %p312 = pneg %p70
        %p313 = pneg %p67
        %p314 = pneg %p91
        %p315 = pneg %p88
        %p316 = pneg %p112
        %p317 = pneg %p109
        %p318 = pneg %p133
        %p319 = pneg %p130
        %p320 = pneg %p154
        %p321 = pneg %p151
        %p322 = pneg %p175
        %p323 = pneg %p172
        %p324 = pneg %p201
        %p325 = pneg %p198
        %s326 = sand.u32 %s188, 1
        %s327 = scalar_lea.sflag [#allocation4], %s326
        %s328 = sand.u32 %s188, 1
        %s329 = smul.addr %s328, 32
        %s330 = scalar_lea.vmem [#allocation8], %s329
        %p331 = scmp.lt.s32.totalorder %s23, 1
        %s332 = scalar_select %p331, %s23, 1
        %s333 = smul.addr %s332, 4
        %s334 = smul.addr %s333, 8
        %s335 = scalar_lea.vmem %s0, %s334
        %p336 = scmp.lt.s32.totalorder %s23, 1
        %s337 = scalar_select %p336, %s23, 1
        %s338 = smul.addr %s337, 4
        %s339 = smul.addr %s338, 8
        %s340 = scalar_lea.vmem %s1, %s339
        %v341 = vld [vmem:[%s4] sm:$0xff]
        %v342 = vld [vmem:[%s340] sm:$0xff]
        %v343 = vld [vmem:[%s340 + $0x8] sm:$0xff]
        %v344 = vld [vmem:[%s340 + $0x10] sm:$0xff]
        %v345 = vld [vmem:[%s340 + $0x18] sm:$0xff]
        %v346 = vld [vmem:[%s335] sm:$0xff]
        %v347 = vld [vmem:[%s335 + $0x8] sm:$0xff]
        %v348 = vld [vmem:[%s335 + $0x10] sm:$0xff]
        %v349 = vld [vmem:[%s335 + $0x18] sm:$0xff]
        %v350 = vld [vmem:[#allocation2] sm:$0xff]
        %v351 = vld [vmem:[#allocation2 + $0x8] sm:$0xff]
        %v352 = vlaneseq
        %v353 = vshrl.u32 %v352, 7
        %v354 = vsub.s32 0, %v353
        %v355 = vrot.slane %v341, %v354
        %vm356 = vcmask 130048
        %v358 = vsel %vm356, %v346, 0
        %v361 = vsel %vm356, %v347, 0
        %v364 = vsel %vm356, %v348, 0
        %v367 = vsel %vm356, %v349, 0
        %369 = vmatprep.subr.mxu0 0.0
        %370 = vmatpush1.msra.mxu0 %v350
        %371 = vmatprep.subr.mxu0 0.0
        %372 = vmatpush1.msra.mxu0 %v351
        %373 = vmatprep.subr.mxu0 0.0
        %374 = vmatpush1.msra.mxu0 0.0
        %375 = vmatprep.subr.mxu0 0.0
        %376 = vmatpush1.msra.mxu0 0.0
        %377 = vmatprep.subr.mxu0 0.0
        %378 = vmatpush1.msra.mxu0 0.0
        %379 = vmatprep.subr.mxu0 0.0
        %380 = vmatpush1.msra.mxu0 0.0
        %381 = vmatprep.subr.mxu0 0.0
        %382 = vmatpush1.msra.mxu0 0.0
        %383 = vmatprep.subr.mxu0 0.0
        %384 = vmatpush1.msra.mxu0 0.0
        %385 = vmatprep.subr.mxu0 0.0
        %386 = vmatpush1.msra.mxu0 0.0
        %387 = vmatprep.subr.mxu0 0.0
        %388 = vmatpush1.msra.mxu0 0.0
        %389 = vmatprep.subr.mxu0 0.0
        %390 = vmatpush1.msra.mxu0 0.0
        %391 = vmatprep.subr.mxu0 0.0
        %392 = vmatpush1.msra.mxu0 0.0
        %393 = vmatprep.subr.mxu0 0.0
        %394 = vmatpush1.msra.mxu0 0.0
        %395 = vmatprep.subr.mxu0 0.0
        %396 = vmatpush1.msra.mxu0 0.0
        %397 = vmatprep.subr.mxu0 0.0
        %398 = vmatpush1.msra.mxu0 0.0
        %399 = vmatprep.subr.mxu0 0.0
        %400 = vmatpush1.msra.mxu0 0.0
        %401 = vmatprep.subr.mxu0 0.0
        %402 = vmatpush1.msra.mxu0 0.0
        %403 = vmatprep.subr.mxu0 0.0
        %404 = vmatpush1.msra.mxu0 0.0
        %405 = vmatprep.subr.mxu0 0.0
        %406 = vmatpush1.msra.mxu0 0.0
        %407 = vmatprep.subr.mxu0 0.0
        %408 = vmatpush1.msra.mxu0 0.0
        %409 = vmatprep.subr.mxu0 0.0
        %410 = vmatpush1.msra.mxu0 0.0
        %411 = vmatprep.subr.mxu0 0.0
        %412 = vmatpush1.msra.mxu0 0.0
        %413 = vmatprep.subr.mxu0 0.0
        %414 = vmatpush1.msra.mxu0 0.0
        %415 = vmatprep.subr.mxu0 0.0
        %416 = vmatpush1.msra.mxu0 0.0
        %417 = vmatprep.subr.mxu0 0.0
        %418 = vmatpush1.msra.mxu0 0.0
        %419 = vmatprep.subr.mxu0 0.0
        %420 = vmatpush1.msra.mxu0 0.0
        %421 = vmatprep.subr.mxu0 0.0
        %422 = vmatpush1.msra.mxu0 0.0
        %423 = vmatprep.subr.mxu0 0.0
        %424 = vmatpush1.msra.mxu0 0.0
        %425 = vmatprep.subr.mxu0 0.0
        %426 = vmatpush1.msra.mxu0 0.0
        %427 = vmatprep.subr.mxu0 0.0
        %428 = vmatpush1.msra.mxu0 0.0
        %429 = vmatprep.subr.mxu0 0.0
        %430 = vmatpush1.msra.mxu0 0.0
        %431 = vmatprep.subr.mxu0 0.0
        %432 = vmatpush1.msra.mxu0 0.0
        %433 = vmatprep.mubr.f32.mxu0 0.0
        %434 = vmatmul.mubr.f32.gmra.mrb[0].mxu0 %v358
        %v435 = vpop.f32.mrb[0].mxu0
        %v436 = vadd.f32 %v355, %v435
        %v437 = vpop.f32.mrb[0].mxu0
        %438 = vmatprep.mubr.f32.mxu0 0.0
        %439 = vmatmul.mubr.f32.gmra.mrb[0].mxu0 %v361
        %v440 = vpop.f32.mrb[0].mxu0
        %v441 = vadd.f32 %v355, %v440
        %v442 = vpop.f32.mrb[0].mxu0
        %443 = vmatprep.mubr.f32.mxu0 0.0
        %444 = vmatmul.mubr.f32.gmra.mrb[0].mxu0 %v364
        %v445 = vpop.f32.mrb[0].mxu0
        %v446 = vadd.f32 %v355, %v445
        %v447 = vpop.f32.mrb[0].mxu0
        %448 = vmatprep.mubr.f32.mxu0 0.0
        %449 = vmatmul.mubr.f32.gmra.mrb[0].mxu0 %v367
        %v450 = vpop.f32.mrb[0].mxu0
        %v451 = vadd.f32 %v355, %v450
        %v452 = vpop.f32.mrb[0].mxu0
        %453 = vdwg.mxu0
        %v454 = vld [vmem:[%s3] sm:$0xff]
        %v455 = vld [vmem:[%s3 + $0x8] sm:$0xff]
        %v456 = vld [vmem:[%s3 + $0x10] sm:$0xff]
        %v457 = vld [vmem:[%s3 + $0x18] sm:$0xff]
        %v458 = vadd.f32 %v436, %v454
        %v459 = vadd.f32 %v441, %v455
        %v460 = vadd.f32 %v446, %v456
        %v461 = vadd.f32 %v451, %v457
        %v462 = vld [vmem:[#allocation5] sm:$0xff]
        %v463 = vld [vmem:[#allocation5 + $0x8] sm:$0xff]
        %v464 = vld [vmem:[#allocation5 + $0x10] sm:$0xff]
        %v465 = vld [vmem:[#allocation5 + $0x18] sm:$0xff]
        %v466 = vld [vmem:[#allocation5 + $0x20] sm:$0xff]
        %v467 = vld [vmem:[#allocation5 + $0x28] sm:$0xff]
        %v468 = vld [vmem:[#allocation5 + $0x30] sm:$0xff]
        %v469 = vld [vmem:[#allocation5 + $0x38] sm:$0xff]
        %v470 = vld [vmem:[#allocation5 + $0x40] sm:$0xff]
        %v471 = vld [vmem:[#allocation5 + $0x48] sm:$0xff]
        %v472 = vld [vmem:[#allocation5 + $0x50] sm:$0xff]
        %v473 = vld [vmem:[#allocation5 + $0x58] sm:$0xff]
        %v474 = vld [vmem:[#allocation5 + $0x60] sm:$0xff]
        %v475 = vld [vmem:[#allocation5 + $0x68] sm:$0xff]
        %v476 = vld [vmem:[#allocation5 + $0x70] sm:$0xff]
        %v477 = vld [vmem:[#allocation5 + $0x78] sm:$0xff]
        %478 = vmatprep.subr.mxu0 0.0
        %479 = vmatpush1.msra.mxu0 %v462
        %480 = vmatprep.subr.mxu0 0.0
        %481 = vmatpush1.msra.mxu0 %v463
        %482 = vmatprep.subr.mxu0 0.0
        %483 = vmatpush1.msra.mxu0 %v464
        %484 = vmatprep.subr.mxu0 0.0
        %485 = vmatpush1.msra.mxu0 %v465
        %486 = vmatprep.subr.mxu0 0.0
        %487 = vmatpush1.msra.mxu0 %v466
        %488 = vmatprep.subr.mxu0 0.0
        %489 = vmatpush1.msra.mxu0 %v467
        %490 = vmatprep.subr.mxu0 0.0
        %491 = vmatpush1.msra.mxu0 %v468
        %492 = vmatprep.subr.mxu0 0.0
        %493 = vmatpush1.msra.mxu0 %v469
        %494 = vmatprep.subr.mxu0 0.0
        %495 = vmatpush1.msra.mxu0 %v470
        %496 = vmatprep.subr.mxu0 0.0
        %497 = vmatpush1.msra.mxu0 %v471
        %498 = vmatprep.subr.mxu0 0.0
        %499 = vmatpush1.msra.mxu0 %v472
        %500 = vmatprep.subr.mxu0 0.0
        %501 = vmatpush1.msra.mxu0 %v473
        %502 = vmatprep.subr.mxu0 0.0
        %503 = vmatpush1.msra.mxu0 %v474
        %504 = vmatprep.subr.mxu0 0.0
        %505 = vmatpush1.msra.mxu0 %v475
        %506 = vmatprep.subr.mxu0 0.0
        %507 = vmatpush1.msra.mxu0 %v476
        %508 = vmatprep.subr.mxu0 0.0
        %509 = vmatpush1.msra.mxu0 %v477
        %510 = vmatprep.subr.mxu0 0.0
        %511 = vmatpush1.msra.mxu0 0.0
        %512 = vmatprep.subr.mxu0 0.0
        %513 = vmatpush1.msra.mxu0 0.0
        %514 = vmatprep.subr.mxu0 0.0
        %515 = vmatpush1.msra.mxu0 0.0
        %516 = vmatprep.subr.mxu0 0.0
        %517 = vmatpush1.msra.mxu0 0.0
        %518 = vmatprep.subr.mxu0 0.0
        %519 = vmatpush1.msra.mxu0 0.0
        %520 = vmatprep.subr.mxu0 0.0
        %521 = vmatpush1.msra.mxu0 0.0
        %522 = vmatprep.subr.mxu0 0.0
        %523 = vmatpush1.msra.mxu0 0.0
        %524 = vmatprep.subr.mxu0 0.0
        %525 = vmatpush1.msra.mxu0 0.0
        %526 = vmatprep.subr.mxu0 0.0
        %527 = vmatpush1.msra.mxu0 0.0
        %528 = vmatprep.subr.mxu0 0.0
        %529 = vmatpush1.msra.mxu0 0.0
        %530 = vmatprep.subr.mxu0 0.0
        %531 = vmatpush1.msra.mxu0 0.0
        %532 = vmatprep.subr.mxu0 0.0
        %533 = vmatpush1.msra.mxu0 0.0
        %534 = vmatprep.subr.mxu0 0.0
        %535 = vmatpush1.msra.mxu0 0.0
        %536 = vmatprep.subr.mxu0 0.0
        %537 = vmatpush1.msra.mxu0 0.0
        %538 = vmatprep.subr.mxu0 0.0
        %539 = vmatpush1.msra.mxu0 0.0
        %540 = vmatprep.subr.mxu0 0.0
        %541 = vmatpush1.msra.mxu0 0.0
        %542 = vmatprep.mubr.f32.mxu0 0.0
        %543 = vmatmul.mubr.f32.gmra.mrb[0].mxu0 %v458
        %v544 = vpop.f32.mrb[0].mxu0
        %v545 = vadd.f32 0.0, %v544
        %v546 = vpop.f32.mrb[0].mxu0
        %547 = vmatprep.mubr.f32.mxu0 0.0
        %548 = vmatmul.mubr.f32.gmra.mrb[0].mxu0 %v459
        %v549 = vpop.f32.mrb[0].mxu0
        %v550 = vadd.f32 0.0, %v549
        %v551 = vpop.f32.mrb[0].mxu0
        %552 = vmatprep.mubr.f32.mxu0 0.0
        %553 = vmatmul.mubr.f32.gmra.mrb[0].mxu0 %v460
        %v554 = vpop.f32.mrb[0].mxu0
        %v555 = vadd.f32 0.0, %v554
        %v556 = vpop.f32.mrb[0].mxu0
        %557 = vmatprep.mubr.f32.mxu0 0.0
        %558 = vmatmul.mubr.f32.gmra.mrb[0].mxu0 %v461
        %v559 = vpop.f32.mrb[0].mxu0
        %v560 = vadd.f32 0.0, %v559
        %v561 = vpop.f32.mrb[0].mxu0
        %562 = vdwg.mxu0
        %v563 = vlaneseq
        %v564 = vshrl.u32 %v563, 7
        %v565 = vsub.s32 2, %v564
        %v566 = vrot.slane %v341, %v565
        %v567 = vmul.f32 %v545, %v566
        %v568 = vmul.f32 %v550, %v566
        %v569 = vmul.f32 %v555, %v566
        %v570 = vmul.f32 %v560, %v566
        %571 = vadd.xlane.f32.xlu0 %v567
        %v572 = vpop.xlane.xlu0 %571
        %573 = vadd.xlane.f32.xlu0 %v568
        %v574 = vpop.xlane.xlu0 %573
        %575 = vadd.xlane.f32.xlu0 %v569
        %v576 = vpop.xlane.xlu0 %575
        %577 = vadd.xlane.f32.xlu0 %v570
        %v578 = vpop.xlane.xlu0 %577
        %v580 = vrot.slane %v341, 1
        %582 = vmatprep.subr.mxu0 0.0
        %583 = vmatpush1.xpose.msra.mxu0 %v545
        %584 = vmatprep.subr.mxu0 0.0
        %585 = vmatpush1.xpose.msra.mxu0 %v550
        %586 = vmatprep.subr.mxu0 0.0
        %587 = vmatpush1.xpose.msra.mxu0 %v555
        %588 = vmatprep.subr.mxu0 0.0
        %589 = vmatpush1.xpose.msra.mxu0 %v560
        %590 = vmatprep.subr.mxu0 0.0
        %591 = vmatpush1.xpose.msra.mxu0 0.0
        %592 = vmatprep.subr.mxu0 0.0
        %593 = vmatpush1.xpose.msra.mxu0 0.0
        %594 = vmatprep.subr.mxu0 0.0
        %595 = vmatpush1.xpose.msra.mxu0 0.0
        %596 = vmatprep.subr.mxu0 0.0
        %597 = vmatpush1.xpose.msra.mxu0 0.0
        %598 = vmatprep.subr.mxu0 0.0
        %599 = vmatpush1.xpose.msra.mxu0 0.0
        %600 = vmatprep.subr.mxu0 0.0
        %601 = vmatpush1.xpose.msra.mxu0 0.0
        %602 = vmatprep.subr.mxu0 0.0
        %603 = vmatpush1.xpose.msra.mxu0 0.0
        %604 = vmatprep.subr.mxu0 0.0
        %605 = vmatpush1.xpose.msra.mxu0 0.0
        %606 = vmatprep.subr.mxu0 0.0
        %607 = vmatpush1.xpose.msra.mxu0 0.0
        %608 = vmatprep.subr.mxu0 0.0
        %609 = vmatpush1.xpose.msra.mxu0 0.0
        %610 = vmatprep.subr.mxu0 0.0
        %611 = vmatpush1.xpose.msra.mxu0 0.0
        %612 = vmatprep.subr.mxu0 0.0
        %613 = vmatpush1.xpose.msra.mxu0 0.0
        %614 = vmatprep.subr.mxu0 0.0
        %615 = vmatpush1.xpose.msra.mxu0 0.0
        %616 = vmatprep.subr.mxu0 0.0
        %617 = vmatpush1.xpose.msra.mxu0 0.0
        %618 = vmatprep.subr.mxu0 0.0
        %619 = vmatpush1.xpose.msra.mxu0 0.0
        %620 = vmatprep.subr.mxu0 0.0
        %621 = vmatpush1.xpose.msra.mxu0 0.0
        %622 = vmatprep.subr.mxu0 0.0
        %623 = vmatpush1.xpose.msra.mxu0 0.0
        %624 = vmatprep.subr.mxu0 0.0
        %625 = vmatpush1.xpose.msra.mxu0 0.0
        %626 = vmatprep.subr.mxu0 0.0
        %627 = vmatpush1.xpose.msra.mxu0 0.0
        %628 = vmatprep.subr.mxu0 0.0
        %629 = vmatpush1.xpose.msra.mxu0 0.0
        %630 = vmatprep.subr.mxu0 0.0
        %631 = vmatpush1.xpose.msra.mxu0 0.0
        %632 = vmatprep.subr.mxu0 0.0
        %633 = vmatpush1.xpose.msra.mxu0 0.0
        %634 = vmatprep.subr.mxu0 0.0
        %635 = vmatpush1.xpose.msra.mxu0 0.0
        %636 = vmatprep.subr.mxu0 0.0
        %637 = vmatpush1.xpose.msra.mxu0 0.0
        %638 = vmatprep.subr.mxu0 0.0
        %639 = vmatpush1.xpose.msra.mxu0 0.0
        %640 = vmatprep.subr.mxu0 0.0
        %641 = vmatpush1.xpose.msra.mxu0 0.0
        %642 = vmatprep.subr.mxu0 0.0
        %643 = vmatpush1.xpose.msra.mxu0 0.0
        %644 = vmatprep.subr.mxu0 0.0
        %645 = vmatpush1.xpose.msra.mxu0 0.0
        %646 = vmatprep.mubr.f32.mxu0 0.0
        %647 = vmatmul.mubr.f32.gmra.mrb[0].mxu0 %v580
        %v648 = vpop.f32.mrb[0].mxu0
        %v649 = vadd.f32 0.0, %v648
        %v650 = vpop.f32.mrb[0].mxu0
        %651 = vdwg.mxu0
        %v652 = vlaneseq
        %v653 = vshrl.u32 %v652, 7
        %v654 = vsub.s32 0, %v653
        %v655 = vrot.slane %v649, %v654
        %v656 = vadd.f32 %v572, %v655
        %v657 = vadd.f32 %v574, %v655
        %v658 = vadd.f32 %v576, %v655
        %v659 = vadd.f32 %v578, %v655
        %vm660 = vcmp.gt.f32.partialorder %v656, 0.0
        %vm661 = vcmp.gt.f32.partialorder %v657, 0.0
        %vm662 = vcmp.gt.f32.partialorder %v658, 0.0
        %vm663 = vcmp.gt.f32.partialorder %v659, 0.0
        %v664 = vmul.f32 %v656, 0.2
        %v665 = vmul.f32 %v657, 0.2
        %v666 = vmul.f32 %v658, 0.2
        %v667 = vmul.f32 %v659, 0.2
        %v668 = vsel %vm660, %v656, %v664
        %v669 = vsel %vm661, %v657, %v665
        %v670 = vsel %vm662, %v658, %v666
        %v671 = vsel %vm663, %v659, %v667
        %vm672 = vcmp.gt.f32.partialorder %v342, 0.0
        %vm673 = vcmp.gt.f32.partialorder %v343, 0.0
        %vm674 = vcmp.gt.f32.partialorder %v344, 0.0
        %vm675 = vcmp.gt.f32.partialorder %v345, 0.0
        %v676 = vsel %vm672, %v668, -1e+30
        %v677 = vsel %vm673, %v669, -1e+30
        %v678 = vsel %vm674, %v670, -1e+30
        %v679 = vsel %vm675, %v671, -1e+30
        %vm680 = vcmask 261120
        %v681 = vsel %vm680, %v676, -inf
        %682 = vmax.xlane.f32.xlu0 %v681
        %v683 = vpop.xlane.xlu0 %682
        %v684 = vsel %vm680, %v677, -inf
        %685 = vmax.xlane.f32.xlu0 %v684
        %v686 = vpop.xlane.xlu0 %685
        %v687 = vsel %vm680, %v678, -inf
        %688 = vmax.xlane.f32.xlu0 %v687
        %v689 = vpop.xlane.xlu0 %688
        %v690 = vsel %vm680, %v679, -inf
        %691 = vmax.xlane.f32.xlu0 %v690
        %v692 = vpop.xlane.xlu0 %691
        %v693 = vsub.f32 %v676, %v683
        %v694 = vsub.f32 %v677, %v686
        %v695 = vsub.f32 %v678, %v689
        %v696 = vsub.f32 %v679, %v692
        %v697 = vmul.f32 %v693, 1.442695
        %v698 = vpow.pop %v697
        %v699 = vmul.f32 %v694, 1.442695
        %v700 = vpow.pop %v699
        %v701 = vmul.f32 %v695, 1.442695
        %v702 = vpow.pop %v701
        %v703 = vmul.f32 %v696, 1.442695
        %v704 = vpow.pop %v703
        %v705 = vsel %vm680, %v698, 0.0
        %706 = vadd.xlane.f32.xlu0 %v705
        %v707 = vpop.xlane.xlu0 %706
        %v708 = vsel %vm680, %v700, 0.0
        %709 = vadd.xlane.f32.xlu0 %v708
        %v710 = vpop.xlane.xlu0 %709
        %v711 = vsel %vm680, %v702, 0.0
        %712 = vadd.xlane.f32.xlu0 %v711
        %v713 = vpop.xlane.xlu0 %712
        %v714 = vsel %vm680, %v704, 0.0
        %715 = vadd.xlane.f32.xlu0 %v714
        %v716 = vpop.xlane.xlu0 %715
        %v717 = vrcp.pop %v707
        %v718 = vrcp.pop %v710
        %v719 = vrcp.pop %v713
        %v720 = vrcp.pop %v716
        %v721 = vmul.f32 %v698, %v717
        %v722 = vmul.f32 %v700, %v718
        %v723 = vmul.f32 %v702, %v719
        %v724 = vmul.f32 %v704, %v720
        %v725 = vlaneseq
        %v726 = vshrl.u32 %v725, 7
        %v727 = vsub.s32 3, %v726
        %v728 = vrot.slane %v341, %v727
        %v730 = vsel %vm680, %v721, 0
        %v733 = vsel %vm680, %v722, 0
        %v736 = vsel %vm680, %v723, 0
        %v739 = vsel %vm680, %v724, 0
        %741 = vmatprep.subr.mxu0 0.0
        %742 = vmatpush1.msra.mxu0 %v545
        %743 = vmatprep.subr.mxu0 0.0
        %744 = vmatpush1.msra.mxu0 %v550
        %745 = vmatprep.subr.mxu0 0.0
        %746 = vmatpush1.msra.mxu0 %v555
        %747 = vmatprep.subr.mxu0 0.0
        %748 = vmatpush1.msra.mxu0 %v560
        %749 = vmatprep.subr.mxu0 0.0
        %750 = vmatpush1.msra.mxu0 0.0
        %751 = vmatprep.subr.mxu0 0.0
        %752 = vmatpush1.msra.mxu0 0.0
        %753 = vmatprep.subr.mxu0 0.0
        %754 = vmatpush1.msra.mxu0 0.0
        %755 = vmatprep.subr.mxu0 0.0
        %756 = vmatpush1.msra.mxu0 0.0
        %757 = vmatprep.subr.mxu0 0.0
        %758 = vmatpush1.msra.mxu0 0.0
        %759 = vmatprep.subr.mxu0 0.0
        %760 = vmatpush1.msra.mxu0 0.0
        %761 = vmatprep.subr.mxu0 0.0
        %762 = vmatpush1.msra.mxu0 0.0
        %763 = vmatprep.subr.mxu0 0.0
        %764 = vmatpush1.msra.mxu0 0.0
        %765 = vmatprep.subr.mxu0 0.0
        %766 = vmatpush1.msra.mxu0 0.0
        %767 = vmatprep.subr.mxu0 0.0
        %768 = vmatpush1.msra.mxu0 0.0
        %769 = vmatprep.subr.mxu0 0.0
        %770 = vmatpush1.msra.mxu0 0.0
        %771 = vmatprep.subr.mxu0 0.0
        %772 = vmatpush1.msra.mxu0 0.0
        %773 = vmatprep.subr.mxu0 0.0
        %774 = vmatpush1.msra.mxu0 0.0
        %775 = vmatprep.subr.mxu0 0.0
        %776 = vmatpush1.msra.mxu0 0.0
        %777 = vmatprep.subr.mxu0 0.0
        %778 = vmatpush1.msra.mxu0 0.0
        %779 = vmatprep.subr.mxu0 0.0
        %780 = vmatpush1.msra.mxu0 0.0
        %781 = vmatprep.subr.mxu0 0.0
        %782 = vmatpush1.msra.mxu0 0.0
        %783 = vmatprep.subr.mxu0 0.0
        %784 = vmatpush1.msra.mxu0 0.0
        %785 = vmatprep.subr.mxu0 0.0
        %786 = vmatpush1.msra.mxu0 0.0
        %787 = vmatprep.subr.mxu0 0.0
        %788 = vmatpush1.msra.mxu0 0.0
        %789 = vmatprep.subr.mxu0 0.0
        %790 = vmatpush1.msra.mxu0 0.0
        %791 = vmatprep.subr.mxu0 0.0
        %792 = vmatpush1.msra.mxu0 0.0
        %793 = vmatprep.subr.mxu0 0.0
        %794 = vmatpush1.msra.mxu0 0.0
        %795 = vmatprep.subr.mxu0 0.0
        %796 = vmatpush1.msra.mxu0 0.0
        %797 = vmatprep.subr.mxu0 0.0
        %798 = vmatpush1.msra.mxu0 0.0
        %799 = vmatprep.subr.mxu0 0.0
        %800 = vmatpush1.msra.mxu0 0.0
        %801 = vmatprep.subr.mxu0 0.0
        %802 = vmatpush1.msra.mxu0 0.0
        %803 = vmatprep.subr.mxu0 0.0
        %804 = vmatpush1.msra.mxu0 0.0
        %805 = vmatprep.mubr.f32.mxu0 0.0
        %806 = vmatmul.mubr.f32.gmra.mrb[0].mxu0 %v730
        %v807 = vpop.f32.mrb[0].mxu0
        %v808 = vadd.f32 %v728, %v807
        %v809 = vpop.f32.mrb[0].mxu0
        %810 = vmatprep.mubr.f32.mxu0 0.0
        %811 = vmatmul.mubr.f32.gmra.mrb[0].mxu0 %v733
        %v812 = vpop.f32.mrb[0].mxu0
        %v813 = vadd.f32 %v728, %v812
        %v814 = vpop.f32.mrb[0].mxu0
        %815 = vmatprep.mubr.f32.mxu0 0.0
        %816 = vmatmul.mubr.f32.gmra.mrb[0].mxu0 %v736
        %v817 = vpop.f32.mrb[0].mxu0
        %v818 = vadd.f32 %v728, %v817
        %v819 = vpop.f32.mrb[0].mxu0
        %820 = vmatprep.mubr.f32.mxu0 0.0
        %821 = vmatmul.mubr.f32.gmra.mrb[0].mxu0 %v739
        %v822 = vpop.f32.mrb[0].mxu0
        %v823 = vadd.f32 %v728, %v822
        %v824 = vpop.f32.mrb[0].mxu0
        %825 = vdwg.mxu0
        %v826 = vmax.f32 %v808, 0.0
        %v827 = vmax.f32 %v813, 0.0
        %v828 = vmax.f32 %v818, 0.0
        %v829 = vmax.f32 %v823, 0.0
        %v830 = vld [vmem:[#allocation7] sm:$0xff]
        %v831 = vld [vmem:[#allocation7 + $0x8] sm:$0xff]
        %v832 = vld [vmem:[#allocation7 + $0x10] sm:$0xff]
        %v833 = vld [vmem:[#allocation7 + $0x18] sm:$0xff]
        %v834 = vld [vmem:[#allocation7 + $0x20] sm:$0xff]
        %v835 = vld [vmem:[#allocation7 + $0x28] sm:$0xff]
        %v836 = vld [vmem:[#allocation7 + $0x30] sm:$0xff]
        %v837 = vld [vmem:[#allocation7 + $0x38] sm:$0xff]
        %v838 = vld [vmem:[#allocation7 + $0x40] sm:$0xff]
        %v839 = vld [vmem:[#allocation7 + $0x48] sm:$0xff]
        %v840 = vld [vmem:[#allocation7 + $0x50] sm:$0xff]
        %v841 = vld [vmem:[#allocation7 + $0x58] sm:$0xff]
        %v842 = vld [vmem:[#allocation7 + $0x60] sm:$0xff]
        %v843 = vld [vmem:[#allocation7 + $0x68] sm:$0xff]
        %v844 = vld [vmem:[#allocation7 + $0x70] sm:$0xff]
        %v845 = vld [vmem:[#allocation7 + $0x78] sm:$0xff]
        %846 = vmatprep.subr.mxu0 0.0
        %847 = vmatpush1.msra.mxu0 %v830
        %848 = vmatprep.subr.mxu0 0.0
        %849 = vmatpush1.msra.mxu0 %v831
        %850 = vmatprep.subr.mxu0 0.0
        %851 = vmatpush1.msra.mxu0 %v832
        %852 = vmatprep.subr.mxu0 0.0
        %853 = vmatpush1.msra.mxu0 %v833
        %854 = vmatprep.subr.mxu0 0.0
        %855 = vmatpush1.msra.mxu0 %v834
        %856 = vmatprep.subr.mxu0 0.0
        %857 = vmatpush1.msra.mxu0 %v835
        %858 = vmatprep.subr.mxu0 0.0
        %859 = vmatpush1.msra.mxu0 %v836
        %860 = vmatprep.subr.mxu0 0.0
        %861 = vmatpush1.msra.mxu0 %v837
        %862 = vmatprep.subr.mxu0 0.0
        %863 = vmatpush1.msra.mxu0 %v838
        %864 = vmatprep.subr.mxu0 0.0
        %865 = vmatpush1.msra.mxu0 %v839
        %866 = vmatprep.subr.mxu0 0.0
        %867 = vmatpush1.msra.mxu0 %v840
        %868 = vmatprep.subr.mxu0 0.0
        %869 = vmatpush1.msra.mxu0 %v841
        %870 = vmatprep.subr.mxu0 0.0
        %871 = vmatpush1.msra.mxu0 %v842
        %872 = vmatprep.subr.mxu0 0.0
        %873 = vmatpush1.msra.mxu0 %v843
        %874 = vmatprep.subr.mxu0 0.0
        %875 = vmatpush1.msra.mxu0 %v844
        %876 = vmatprep.subr.mxu0 0.0
        %877 = vmatpush1.msra.mxu0 %v845
        %878 = vmatprep.subr.mxu0 0.0
        %879 = vmatpush1.msra.mxu0 0.0
        %880 = vmatprep.subr.mxu0 0.0
        %881 = vmatpush1.msra.mxu0 0.0
        %882 = vmatprep.subr.mxu0 0.0
        %883 = vmatpush1.msra.mxu0 0.0
        %884 = vmatprep.subr.mxu0 0.0
        %885 = vmatpush1.msra.mxu0 0.0
        %886 = vmatprep.subr.mxu0 0.0
        %887 = vmatpush1.msra.mxu0 0.0
        %888 = vmatprep.subr.mxu0 0.0
        %889 = vmatpush1.msra.mxu0 0.0
        %890 = vmatprep.subr.mxu0 0.0
        %891 = vmatpush1.msra.mxu0 0.0
        %892 = vmatprep.subr.mxu0 0.0
        %893 = vmatpush1.msra.mxu0 0.0
        %894 = vmatprep.subr.mxu0 0.0
        %895 = vmatpush1.msra.mxu0 0.0
        %896 = vmatprep.subr.mxu0 0.0
        %897 = vmatpush1.msra.mxu0 0.0
        %898 = vmatprep.subr.mxu0 0.0
        %899 = vmatpush1.msra.mxu0 0.0
        %900 = vmatprep.subr.mxu0 0.0
        %901 = vmatpush1.msra.mxu0 0.0
        %902 = vmatprep.subr.mxu0 0.0
        %903 = vmatpush1.msra.mxu0 0.0
        %904 = vmatprep.subr.mxu0 0.0
        %905 = vmatpush1.msra.mxu0 0.0
        %906 = vmatprep.subr.mxu0 0.0
        %907 = vmatpush1.msra.mxu0 0.0
        %908 = vmatprep.subr.mxu0 0.0
        %909 = vmatpush1.msra.mxu0 0.0
        %910 = vmatprep.mubr.f32.mxu0 0.0
        %911 = vmatmul.mubr.f32.gmra.mrb[0].mxu0 %v826
        %v912 = vpop.f32.mrb[0].mxu0
        %v913 = vadd.f32 0.0, %v912
        %v914 = vpop.f32.mrb[0].mxu0
        %915 = vmatprep.mubr.f32.mxu0 0.0
        %916 = vmatmul.mubr.f32.gmra.mrb[0].mxu0 %v827
        %v917 = vpop.f32.mrb[0].mxu0
        %v918 = vadd.f32 0.0, %v917
        %v919 = vpop.f32.mrb[0].mxu0
        %920 = vmatprep.mubr.f32.mxu0 0.0
        %921 = vmatmul.mubr.f32.gmra.mrb[0].mxu0 %v828
        %v922 = vpop.f32.mrb[0].mxu0
        %v923 = vadd.f32 0.0, %v922
        %v924 = vpop.f32.mrb[0].mxu0
        %925 = vmatprep.mubr.f32.mxu0 0.0
        %926 = vmatmul.mubr.f32.gmra.mrb[0].mxu0 %v829
        %v927 = vpop.f32.mrb[0].mxu0
        %v928 = vadd.f32 0.0, %v927
        %v929 = vpop.f32.mrb[0].mxu0
        %930 = vdwg.mxu0
        %v931 = vlaneseq
        %v932 = vshrl.u32 %v931, 7
        %v933 = vsub.s32 5, %v932
        %v934 = vrot.slane %v341, %v933
        %v935 = vmul.f32 %v913, %v934
        %v936 = vmul.f32 %v918, %v934
        %v937 = vmul.f32 %v923, %v934
        %v938 = vmul.f32 %v928, %v934
        %939 = vadd.xlane.f32.xlu0 %v935
        %v940 = vpop.xlane.xlu0 %939
        %941 = vadd.xlane.f32.xlu0 %v936
        %v942 = vpop.xlane.xlu0 %941
        %943 = vadd.xlane.f32.xlu0 %v937
        %v944 = vpop.xlane.xlu0 %943
        %945 = vadd.xlane.f32.xlu0 %v938
        %v946 = vpop.xlane.xlu0 %945
        %v947 = vrot.slane %v341, 4
        %949 = vmatprep.subr.mxu0 0.0
        %950 = vmatpush1.xpose.msra.mxu0 %v913
        %951 = vmatprep.subr.mxu0 0.0
        %952 = vmatpush1.xpose.msra.mxu0 %v918
        %953 = vmatprep.subr.mxu0 0.0
        %954 = vmatpush1.xpose.msra.mxu0 %v923
        %955 = vmatprep.subr.mxu0 0.0
        %956 = vmatpush1.xpose.msra.mxu0 %v928
        %957 = vmatprep.subr.mxu0 0.0
        %958 = vmatpush1.xpose.msra.mxu0 0.0
        %959 = vmatprep.subr.mxu0 0.0
        %960 = vmatpush1.xpose.msra.mxu0 0.0
        %961 = vmatprep.subr.mxu0 0.0
        %962 = vmatpush1.xpose.msra.mxu0 0.0
        %963 = vmatprep.subr.mxu0 0.0
        %964 = vmatpush1.xpose.msra.mxu0 0.0
        %965 = vmatprep.subr.mxu0 0.0
        %966 = vmatpush1.xpose.msra.mxu0 0.0
        %967 = vmatprep.subr.mxu0 0.0
        %968 = vmatpush1.xpose.msra.mxu0 0.0
        %969 = vmatprep.subr.mxu0 0.0
        %970 = vmatpush1.xpose.msra.mxu0 0.0
        %971 = vmatprep.subr.mxu0 0.0
        %972 = vmatpush1.xpose.msra.mxu0 0.0
        %973 = vmatprep.subr.mxu0 0.0
        %974 = vmatpush1.xpose.msra.mxu0 0.0
        %975 = vmatprep.subr.mxu0 0.0
        %976 = vmatpush1.xpose.msra.mxu0 0.0
        %977 = vmatprep.subr.mxu0 0.0
        %978 = vmatpush1.xpose.msra.mxu0 0.0
        %979 = vmatprep.subr.mxu0 0.0
        %980 = vmatpush1.xpose.msra.mxu0 0.0
        %981 = vmatprep.subr.mxu0 0.0
        %982 = vmatpush1.xpose.msra.mxu0 0.0
        %983 = vmatprep.subr.mxu0 0.0
        %984 = vmatpush1.xpose.msra.mxu0 0.0
        %985 = vmatprep.subr.mxu0 0.0
        %986 = vmatpush1.xpose.msra.mxu0 0.0
        %987 = vmatprep.subr.mxu0 0.0
        %988 = vmatpush1.xpose.msra.mxu0 0.0
        %989 = vmatprep.subr.mxu0 0.0
        %990 = vmatpush1.xpose.msra.mxu0 0.0
        %991 = vmatprep.subr.mxu0 0.0
        %992 = vmatpush1.xpose.msra.mxu0 0.0
        %993 = vmatprep.subr.mxu0 0.0
        %994 = vmatpush1.xpose.msra.mxu0 0.0
        %995 = vmatprep.subr.mxu0 0.0
        %996 = vmatpush1.xpose.msra.mxu0 0.0
        %997 = vmatprep.subr.mxu0 0.0
        %998 = vmatpush1.xpose.msra.mxu0 0.0
        %999 = vmatprep.subr.mxu0 0.0
        %1000 = vmatpush1.xpose.msra.mxu0 0.0
        %1001 = vmatprep.subr.mxu0 0.0
        %1002 = vmatpush1.xpose.msra.mxu0 0.0
        %1003 = vmatprep.subr.mxu0 0.0
        %1004 = vmatpush1.xpose.msra.mxu0 0.0
        %1005 = vmatprep.subr.mxu0 0.0
        %1006 = vmatpush1.xpose.msra.mxu0 0.0
        %1007 = vmatprep.subr.mxu0 0.0
        %1008 = vmatpush1.xpose.msra.mxu0 0.0
        %1009 = vmatprep.subr.mxu0 0.0
        %1010 = vmatpush1.xpose.msra.mxu0 0.0
        %1011 = vmatprep.subr.mxu0 0.0
        %1012 = vmatpush1.xpose.msra.mxu0 0.0
        %1013 = vmatprep.mubr.f32.mxu0 0.0
        %1014 = vmatmul.mubr.f32.gmra.mrb[0].mxu0 %v947
        %v1015 = vpop.f32.mrb[0].mxu0
        %v1016 = vadd.f32 0.0, %v1015
        %v1017 = vpop.f32.mrb[0].mxu0
        %1018 = vdwg.mxu0
        %v1019 = vlaneseq
        %v1020 = vshrl.u32 %v1019, 7
        %v1021 = vsub.s32 0, %v1020
        %v1022 = vrot.slane %v1016, %v1021
        %v1023 = vadd.f32 %v940, %v1022
        %v1024 = vadd.f32 %v942, %v1022
        %v1025 = vadd.f32 %v944, %v1022
        %v1026 = vadd.f32 %v946, %v1022
        %vm1027 = vcmp.gt.f32.partialorder %v1023, 0.0
        %vm1028 = vcmp.gt.f32.partialorder %v1024, 0.0
        %vm1029 = vcmp.gt.f32.partialorder %v1025, 0.0
        %vm1030 = vcmp.gt.f32.partialorder %v1026, 0.0
        %v1031 = vmul.f32 %v1023, 0.2
        %v1032 = vmul.f32 %v1024, 0.2
        %v1033 = vmul.f32 %v1025, 0.2
        %v1034 = vmul.f32 %v1026, 0.2
        %v1035 = vsel %vm1027, %v1023, %v1031
        %v1036 = vsel %vm1028, %v1024, %v1032
        %v1037 = vsel %vm1029, %v1025, %v1033
        %v1038 = vsel %vm1030, %v1026, %v1034
        %v1039 = vsel %vm672, %v1035, -1e+30
        %v1040 = vsel %vm673, %v1036, -1e+30
        %v1041 = vsel %vm674, %v1037, -1e+30
        %v1042 = vsel %vm675, %v1038, -1e+30
        %v1043 = vsel %vm680, %v1039, -inf
        %1044 = vmax.xlane.f32.xlu0 %v1043
        %v1045 = vpop.xlane.xlu0 %1044
        %v1046 = vsel %vm680, %v1040, -inf
        %1047 = vmax.xlane.f32.xlu0 %v1046
        %v1048 = vpop.xlane.xlu0 %1047
        %v1049 = vsel %vm680, %v1041, -inf
        %1050 = vmax.xlane.f32.xlu0 %v1049
        %v1051 = vpop.xlane.xlu0 %1050
        %v1052 = vsel %vm680, %v1042, -inf
        %1053 = vmax.xlane.f32.xlu0 %v1052
        %v1054 = vpop.xlane.xlu0 %1053
        %v1055 = vsub.f32 %v1039, %v1045
        %v1056 = vsub.f32 %v1040, %v1048
        %v1057 = vsub.f32 %v1041, %v1051
        %v1058 = vsub.f32 %v1042, %v1054
        %v1059 = vmul.f32 %v1055, 1.442695
        %v1060 = vpow.pop %v1059
        %v1061 = vmul.f32 %v1056, 1.442695
        %v1062 = vpow.pop %v1061
        %v1063 = vmul.f32 %v1057, 1.442695
        %v1064 = vpow.pop %v1063
        %v1065 = vmul.f32 %v1058, 1.442695
        %v1066 = vpow.pop %v1065
        %v1067 = vsel %vm680, %v1060, 0.0
        %1068 = vadd.xlane.f32.xlu0 %v1067
        %v1069 = vpop.xlane.xlu0 %1068
        %v1070 = vsel %vm680, %v1062, 0.0
        %1071 = vadd.xlane.f32.xlu0 %v1070
        %v1072 = vpop.xlane.xlu0 %1071
        %v1073 = vsel %vm680, %v1064, 0.0
        %1074 = vadd.xlane.f32.xlu0 %v1073
        %v1075 = vpop.xlane.xlu0 %1074
        %v1076 = vsel %vm680, %v1066, 0.0
        %1077 = vadd.xlane.f32.xlu0 %v1076
        %v1078 = vpop.xlane.xlu0 %1077
        %v1079 = vrcp.pop %v1069
        %v1080 = vrcp.pop %v1072
        %v1081 = vrcp.pop %v1075
        %v1082 = vrcp.pop %v1078
        %v1083 = vmul.f32 %v1060, %v1079
        %v1084 = vmul.f32 %v1062, %v1080
        %v1085 = vmul.f32 %v1064, %v1081
        %v1086 = vmul.f32 %v1066, %v1082
        %v1087 = vlaneseq
        %v1088 = vshrl.u32 %v1087, 7
        %v1089 = vsub.s32 6, %v1088
        %v1090 = vrot.slane %v341, %v1089
        %v1092 = vsel %vm680, %v1083, 0
        %v1095 = vsel %vm680, %v1084, 0
        %v1098 = vsel %vm680, %v1085, 0
        %v1101 = vsel %vm680, %v1086, 0
        %1103 = vmatprep.subr.mxu0 0.0
        %1104 = vmatpush1.msra.mxu0 %v913
        %1105 = vmatprep.subr.mxu0 0.0
        %1106 = vmatpush1.msra.mxu0 %v918
        %1107 = vmatprep.subr.mxu0 0.0
        %1108 = vmatpush1.msra.mxu0 %v923
        %1109 = vmatprep.subr.mxu0 0.0
        %1110 = vmatpush1.msra.mxu0 %v928
        %1111 = vmatprep.subr.mxu0 0.0
        %1112 = vmatpush1.msra.mxu0 0.0
        %1113 = vmatprep.subr.mxu0 0.0
        %1114 = vmatpush1.msra.mxu0 0.0
        %1115 = vmatprep.subr.mxu0 0.0
        %1116 = vmatpush1.msra.mxu0 0.0
        %1117 = vmatprep.subr.mxu0 0.0
        %1118 = vmatpush1.msra.mxu0 0.0
        %1119 = vmatprep.subr.mxu0 0.0
        %1120 = vmatpush1.msra.mxu0 0.0
        %1121 = vmatprep.subr.mxu0 0.0
        %1122 = vmatpush1.msra.mxu0 0.0
        %1123 = vmatprep.subr.mxu0 0.0
        %1124 = vmatpush1.msra.mxu0 0.0
        %1125 = vmatprep.subr.mxu0 0.0
        %1126 = vmatpush1.msra.mxu0 0.0
        %1127 = vmatprep.subr.mxu0 0.0
        %1128 = vmatpush1.msra.mxu0 0.0
        %1129 = vmatprep.subr.mxu0 0.0
        %1130 = vmatpush1.msra.mxu0 0.0
        %1131 = vmatprep.subr.mxu0 0.0
        %1132 = vmatpush1.msra.mxu0 0.0
        %1133 = vmatprep.subr.mxu0 0.0
        %1134 = vmatpush1.msra.mxu0 0.0
        %1135 = vmatprep.subr.mxu0 0.0
        %1136 = vmatpush1.msra.mxu0 0.0
        %1137 = vmatprep.subr.mxu0 0.0
        %1138 = vmatpush1.msra.mxu0 0.0
        %1139 = vmatprep.subr.mxu0 0.0
        %1140 = vmatpush1.msra.mxu0 0.0
        %1141 = vmatprep.subr.mxu0 0.0
        %1142 = vmatpush1.msra.mxu0 0.0
        %1143 = vmatprep.subr.mxu0 0.0
        %1144 = vmatpush1.msra.mxu0 0.0
        %1145 = vmatprep.subr.mxu0 0.0
        %1146 = vmatpush1.msra.mxu0 0.0
        %1147 = vmatprep.subr.mxu0 0.0
        %1148 = vmatpush1.msra.mxu0 0.0
        %1149 = vmatprep.subr.mxu0 0.0
        %1150 = vmatpush1.msra.mxu0 0.0
        %1151 = vmatprep.subr.mxu0 0.0
        %1152 = vmatpush1.msra.mxu0 0.0
        %1153 = vmatprep.subr.mxu0 0.0
        %1154 = vmatpush1.msra.mxu0 0.0
        %1155 = vmatprep.subr.mxu0 0.0
        %1156 = vmatpush1.msra.mxu0 0.0
        %1157 = vmatprep.subr.mxu0 0.0
        %1158 = vmatpush1.msra.mxu0 0.0
        %1159 = vmatprep.subr.mxu0 0.0
        %1160 = vmatpush1.msra.mxu0 0.0
        %1161 = vmatprep.subr.mxu0 0.0
        %1162 = vmatpush1.msra.mxu0 0.0
        %1163 = vmatprep.subr.mxu0 0.0
        %1164 = vmatpush1.msra.mxu0 0.0
        %1165 = vmatprep.subr.mxu0 0.0
        %1166 = vmatpush1.msra.mxu0 0.0
        %1167 = vmatprep.mubr.f32.mxu0 0.0
        %1168 = vmatmul.mubr.f32.gmra.mrb[0].mxu0 %v1092
        %v1169 = vpop.f32.mrb[0].mxu0
        %v1170 = vadd.f32 %v1090, %v1169
        %v1171 = vpop.f32.mrb[0].mxu0
        %1172 = vmatprep.mubr.f32.mxu0 0.0
        %1173 = vmatmul.mubr.f32.gmra.mrb[0].mxu0 %v1095
        %v1174 = vpop.f32.mrb[0].mxu0
        %v1175 = vadd.f32 %v1090, %v1174
        %v1176 = vpop.f32.mrb[0].mxu0
        %1177 = vmatprep.mubr.f32.mxu0 0.0
        %1178 = vmatmul.mubr.f32.gmra.mrb[0].mxu0 %v1098
        %v1179 = vpop.f32.mrb[0].mxu0
        %v1180 = vadd.f32 %v1090, %v1179
        %v1181 = vpop.f32.mrb[0].mxu0
        %1182 = vmatprep.mubr.f32.mxu0 0.0
        %1183 = vmatmul.mubr.f32.gmra.mrb[0].mxu0 %v1101
        %v1184 = vpop.f32.mrb[0].mxu0
        %v1185 = vadd.f32 %v1090, %v1184
        %v1186 = vpop.f32.mrb[0].mxu0
        %1187 = vdwg.mxu0
        %v1188 = vmax.f32 %v1170, 0.0
        %v1189 = vmax.f32 %v1175, 0.0
        %v1190 = vmax.f32 %v1180, 0.0
        %v1191 = vmax.f32 %v1185, 0.0
        %1192 = vst [vmem:[%s330] sm:$0xff] %v1188
        %1193 = vst [vmem:[%s330 + $0x8] sm:$0xff] %v1189
        %1194 = vst [vmem:[%s330 + $0x10] sm:$0xff] %v1190
        %1195 = vst [vmem:[%s330 + $0x18] sm:$0xff] %v1191
        %s1196 = sand.u32 %s188, 1
        %s1197 = scalar_lea.sflag [#allocation4], %s1196
        %s1198 = sand.u32 %s188, 1
        %s1199 = smul.addr %s1198, 32
        %s1200 = scalar_lea.vmem [#allocation8], %s1199
        // Predicated region
        $region61: #{tpu_custom_call.1} parent=47 // pred_check
          %p1201 = pneg %p198
        $region62: #{tpu_custom_call.1} parent=47 // pred_check_branch
          %1203 = sbr.rel (%p1201) target = $region64
        $region63: #{tpu_custom_call.1} parent=47 // pred_region
          %s1205 = ssub.s32 512, 512
          %1206 = vsyncadd %s1197, %s1205
          %s1207 = smul.addr %s23, 4
          %s1208 = smul.addr %s1207, 128
          %s1209 = scalar_lea.hbm %s7, %s1208
          %s1210 = sshll.u32 %s1200, 4
          %s1211 = int_to_ptr.vmem [resolvable:$true] %s1210
          %1216 = dma.vmem_to_hbm [thread:$0]  %s1211, 512, %s1209, %s1197, 128, 128, 8
        $region64: #{tpu_custom_call.1} parent=47 // pred_fallthru
          _
      $region48: #{tpu_custom_call.1} parent=5 // pred_fallthru
        _
      %p1217 = scmp.le.s32.totalorder 2, %s18
      // Predicated region
      $region65: #{tpu_custom_call.1} parent=5 // pred_check
        %p1218 = pneg %p1217
      $region66: #{tpu_custom_call.1} parent=5 // pred_check_branch
        %1220 = sbr.rel (%p1218) target = $region68
      $region67: #{tpu_custom_call.1} parent=5 // pred_region
        %s1221 = ssub.s32 %s18, 2
        // Predicated region
        $region69: #{tpu_custom_call.1} parent=67 // pred_check
          %p1222 = pneg %p204
        $region70: #{tpu_custom_call.1} parent=67 // pred_check_branch
          %1224 = sbr.rel (%p1222) target = $region72
        $region71: #{tpu_custom_call.1} parent=67 // pred_region
          %s1225 = sand.u32 %s189, 1
          %s1226 = scalar_lea.sflag [#allocation4], %s1225
          %s1227 = sand.u32 %s189, 1
          %s1228 = smul.addr %s1227, 32
          %s1229 = scalar_lea.vmem [#allocation8], %s1228
          %1230 = dma.done %s1226, 512
        $region72: #{tpu_custom_call.1} parent=67 // pred_fallthru
          _
      $region68: #{tpu_custom_call.1} parent=5 // pred_fallthru
        _
    $region6: #{tpu_custom_call.1} parent=1 // loop_footer
      %s22 = sadd.s32 1, %s18
    $region7: #{tpu_custom_call.1} parent=1 // loop_footer_branch
      %17 = sbr.rel target = $region3
    $region8: #{tpu_custom_call.1} parent=1 // loop_exit
      _
    %1231 = vsyncpa [#allocation3], 1
    %s1232 = scalar_lea.sflag [#allocation3], 1
    %1233 = vsyncpa %s1232, 1
    %1234 = vsyncpa [#allocation6], 1
    %1235 = vsyncpa [#allocation4], 1
    %s1236 = scalar_lea.sflag [#allocation4], 1
    %1237 = vsyncpa %s1236, 1

</llo_original>
